<compile_context>
chip_gen: v5e
topology: v5e:2x2
jax: 0.10.0
libtpu: 0.0.40
codegen_flags: <defaults>
</compile_context>

<pallas_src>
import jax
import jax.numpy as jnp
from jax import lax
from jax.experimental import pallas as pl
from jax.experimental.pallas import tpu as pltpu

LANE = 128                         # TPU lane width; channel/feature dims pad to this.

# Representative spec shapes.
N_IMG, C_IN, H_IN, W_IN = 2, 4, 16, 16
C1, C2, HID, NCLS = 32, 64, 32, 10
K1 = 3 * 3 * C_IN                  # conv1 dense im2col contraction length (36)
M1 = (H_IN // 2) * (W_IN // 2)     # pooled-map pixels after pool1 (64 = 8x8)


# ---------------------------------------------------------------------------
# Fused whole-graph kernel (one image per grid step)
# ---------------------------------------------------------------------------
def _fused_forward_kernel(p1_ref, w1_ref, b1_ref, w2_ref, b2_ref,
                          wl1_ref, bl1_ref, wl2_ref, bl2_ref,
                          out_ref, pad_ref):
    f32, bf16 = jnp.float32, jnp.bfloat16

    # ---- conv1 (dense-K im2col matmul) fused with maxpool1 -----------------
    # p1_ref[0, q] holds the im2col rows of the q-th pixel of every 2x2 pool
    # window (K = 36 real taps*cin, padded to 128 lanes).  Pool1 = running max.
    w1 = w1_ref[...]
    m = jnp.dot(p1_ref[0, 0], w1, preferred_element_type=f32)          # (64, 128)
    for q in range(1, 4):
        m = jnp.maximum(m, jnp.dot(p1_ref[0, q], w1,
                                   preferred_element_type=f32))
    # bias + ReLU commute with the per-channel window max (both monotone).
    y1 = jnp.maximum(m + b1_ref[...], 0.0)                             # (64,128) = 8x8xC map

    # ---- conv2: padded window in VMEM scratch, 9 tap matmuls ---------------
    pad_ref[...] = jnp.zeros(pad_ref.shape, pad_ref.dtype)
    pad_ref[1:9, 1:9, :] = y1.reshape(8, 8, LANE)
    acc = jnp.zeros((64, LANE), f32)
    for t in range(9):
        di, dj = t // 3, t % 3
        patch = pad_ref[di:di + 8, dj:dj + 8, :].reshape(64, LANE)
        acc = acc + jnp.dot(patch.astype(bf16), w2_ref[t],
                            preferred_element_type=f32)
    z = jnp.maximum(acc + b2_ref[...], 0.0)                            # (64,128) = 8x8xC map

    # ---- maxpool2 (2x2, stride 2), channels resident in lanes --------------
    # h-direction: max of adjacent 8-row slabs (aligned slices).
    # w-direction: max of row-shifted overlaps; even rows hold the valid cols.
    pooled = []
    for i in range(4):
        hm = jnp.maximum(z[(2 * i) * 8:(2 * i + 1) * 8, :],
                         z[(2 * i + 1) * 8:(2 * i + 2) * 8, :])        # (8, 128)
        pooled.append(jnp.maximum(hm[0:7, :], hm[1:8, :]))             # (7, 128)

    # ---- adaptiveAvgPool2d((2,2)) + flatten (NHWC order) -------------------
    feats = []
    for oh in range(2):
        for ow in range(2):
            s = (pooled[2 * oh][4 * ow:4 * ow + 1, :] +
                 pooled[2 * oh][4 * ow + 2:4 * ow + 3, :] +
                 pooled[2 * oh + 1][4 * ow:4 * ow + 1, :] +
                 pooled[2 * oh + 1][4 * ow + 2:4 * ow + 3, :])
            feats.append(0.25 * s)                                     # (1, 128)
    feat = jnp.concatenate(feats, axis=1)                              # (1, 512)

    # ---- linear(256->32) + ReLU + linear(32->10) ---------------------------
    h = jnp.dot(feat.astype(bf16), wl1_ref[...],
                preferred_element_type=f32) + bl1_ref[...]
    h = jnp.maximum(h, 0.0)
    logits = jnp.dot(h.astype(bf16), wl2_ref[...],
                     preferred_element_type=f32) + bl2_ref[...]
    out_ref[...] = logits[None].astype(out_ref.dtype)                  # (1, 1, 128)


def _fixed(shape):
    return pl.BlockSpec(shape, lambda *_: (0,) * len(shape))


def fused_forward(p1, pp):
    """Single pallas_call for the whole layer graph.  p1: (N, 4, 64, 128) bf16."""
    n = p1.shape[0]
    flops = 2 * n * ((H_IN * W_IN) * K1 * C1
                     + M1 * (9 * C1) * C2
                     + (2 * 2 * C2) * HID
                     + HID * NCLS)
    bytes_accessed = (int(p1.size) * p1.dtype.itemsize
                      + sum(int(v.size) * v.dtype.itemsize for v in pp.values())
                      + n * LANE * 4)
    out = pl.pallas_call(
        _fused_forward_kernel,
        out_shape=jax.ShapeDtypeStruct((n, 1, LANE), jnp.float32),
        grid=(n,),
        in_specs=[
            pl.BlockSpec((1, 4, M1, LANE), lambda i: (i, 0, 0, 0)),    # conv1 im2col
            _fixed((LANE, LANE)),        # w1  (36x32 real)
            _fixed((1, LANE)),           # b1
            _fixed((9, LANE, LANE)),     # w2  (9 taps, 32x64 real each)
            _fixed((1, LANE)),           # b2
            _fixed((4 * LANE, LANE)),    # wl1 (avg-pool positions x channels, 256x32 real)
            _fixed((1, LANE)),           # bl1
            _fixed((LANE, LANE)),        # wl2 (32x10 real)
            _fixed((1, LANE)),           # bl2
        ],
        out_specs=pl.BlockSpec((1, 1, LANE), lambda i: (i, 0, 0)),
        scratch_shapes=[pltpu.VMEM((10, 10, LANE), jnp.float32)],      # conv2 padded window
        compiler_params=pltpu.CompilerParams(
            dimension_semantics=("parallel",),
            vmem_limit_bytes=32 * 1024 * 1024),
        cost_estimate=pl.CostEstimate(flops=flops, transcendentals=0,
                                      bytes_accessed=bytes_accessed),
    )(p1, pp['w1'], pp['b1'], pp['w2'], pp['b2'],
      pp['wl1'], pp['bl1'], pp['wl2'], pp['bl2'])
    return out[:, 0, :]


def _conv1_pool_groups(x_nhwc):
    """One-shot wrapper-side repack of the conv1 input: 3x3 im2col with taps
    folded into a dense K of 36 (padded to 128), rows grouped by 2x2 maxpool
    window so pool1 becomes a running max inside the kernel.  Layout plumbing
    on a tiny tensor, done once per forward."""
    n, h, w, c = x_nhwc.shape
    assert (h, w, c) == (H_IN, W_IN, C_IN)
    xp = jnp.pad(x_nhwc, ((0, 0), (1, 1), (1, 1), (0, 0)))
    taps = jnp.concatenate([xp[:, di:di + h, dj:dj + w, :]
                            for di in range(3) for dj in range(3)], axis=-1)
    t = taps.reshape(n, h // 2, 2, w // 2, 2, 9 * c)
    t = t.transpose(0, 2, 4, 1, 3, 5).reshape(n, 4, (h // 2) * (w // 2), 9 * c)
    t = jnp.pad(t, ((0, 0), (0, 0), (0, 0), (0, LANE - 9 * c)))
    return t.astype(jnp.bfloat16)


# ---------------------------------------------------------------------------
# Parameters (one-time host-side packing) and forward passes
# ---------------------------------------------------------------------------
def init_params(key, cin, c1, c2, hid, ncls):
    ks = jax.random.split(key, 8)
    w1 = 0.1 * jax.random.normal(ks[0], (3, 3, cin, c1), jnp.float32)   # HWIO
    b1 = 0.1 * jax.random.normal(ks[1], (c1,), jnp.float32)
    w2 = 0.1 * jax.random.normal(ks[2], (3, 3, c1, c2), jnp.float32)
    b2 = 0.1 * jax.random.normal(ks[3], (c2,), jnp.float32)
    # linear-1 weights generated directly in NHWC (h, w, c, out) flatten order
    # (a PyTorch NCHW-flatten checkpoint would be permuted once here).
    wl1 = 0.1 * jax.random.normal(ks[4], (2, 2, c2, hid), jnp.float32)
    bl1 = 0.1 * jax.random.normal(ks[5], (hid,), jnp.float32)
    wl2 = 0.1 * jax.random.normal(ks[6], (hid, ncls), jnp.float32)
    bl2 = 0.1 * jax.random.normal(ks[7], (ncls,), jnp.float32)
    return dict(w1=w1, b1=b1, w2=w2, b2=b2, wl1=wl1, bl1=bl1, wl2=wl2, bl2=bl2)


def pack_params(p):
    """One-time repack: bf16 MXU operands, feature dims zero-padded to 128
    lanes, conv taps folded into matmul K, avgpool positions folded into wl1's
    row order.  Zero padding propagates exactly (zero weights x finite acts)."""
    bf16 = jnp.bfloat16

    def bias(b):
        return jnp.zeros((1, LANE), jnp.float32).at[0, :b.shape[0]].set(b)

    kh, kw, cin, c1 = p['w1'].shape
    w1 = jnp.zeros((LANE, LANE), jnp.float32)
    w1 = w1.at[:kh * kw * cin, :c1].set(p['w1'].reshape(kh * kw * cin, c1))

    _, _, c1b, c2 = p['w2'].shape
    w2 = jnp.zeros((9, LANE, LANE), jnp.float32)
    w2 = w2.at[:, :c1b, :c2].set(p['w2'].reshape(9, c1b, c2))

    hh, ww, c2b, hid = p['wl1'].shape
    wl1 = jnp.zeros((hh * ww, LANE, LANE), jnp.float32)
    wl1 = wl1.at[:, :c2b, :hid].set(p['wl1'].reshape(hh * ww, c2b, hid))
    wl1 = wl1.reshape(hh * ww * LANE, LANE)

    hidb, ncls = p['wl2'].shape
    wl2 = jnp.zeros((LANE, LANE), jnp.float32).at[:hidb, :ncls].set(p['wl2'])

    return dict(w1=w1.astype(bf16), b1=bias(p['b1']),
                w2=w2.astype(bf16), b2=bias(p['b2']),
                wl1=wl1.astype(bf16), bl1=bias(p['bl1']),
                wl2=wl2.astype(bf16), bl2=bias(p['bl2']))


def forward_pallas(x_nchw, pp, ncls):
    """Pallas forward of the representative RunnableModule layer graph
    (single-device spec, all layers active).  Mirrors RunnableModule.forward's
    return of (tensorToReturn, runCriterionAndLoss)."""
    x = jnp.transpose(x_nchw, (0, 2, 3, 1))           # NCHW -> NHWC, once
    p1 = _conv1_pool_groups(x)                        # dense-K conv1 im2col
    logits = fused_forward(p1, pp)                    # one fused Pallas kernel
    return logits[:, :ncls], True


def forward_reference(x_nchw, p):
    """Pure-JAX (XLA, all-f32) reference of the same layer graph."""
    x = jnp.transpose(x_nchw, (0, 2, 3, 1))
    dn = ('NHWC', 'HWIO', 'NHWC')

    def pool2x2(y, mode):
        n, hh, ww, c = y.shape
        y = y.reshape(n, hh // 2, 2, ww // 2, 2, c)
        return y.max(axis=(2, 4)) if mode == 'max' else y.mean(axis=(2, 4))

    y = lax.conv_general_dilated(x, p['w1'], (1, 1), 'SAME', dimension_numbers=dn)
    y = jax.nn.relu(y + p['b1'])
    y = pool2x2(y, 'max')
    y = lax.conv_general_dilated(y, p['w2'], (1, 1), 'SAME', dimension_numbers=dn)
    y = jax.nn.relu(y + p['b2'])
    y = pool2x2(y, 'max')
    y = pool2x2(y, 'avg')                       # adaptive avg pool 4x4 -> 2x2
    f = y.reshape(y.shape[0], -1)               # flatten, NHWC (h, w, c) order
    hid = jax.nn.relu(f @ p['wl1'].reshape(-1, p['wl1'].shape[-1]) + p['bl1'])
    return hid @ p['wl2'] + p['bl2']


if __name__ == "__main__":
    key = jax.random.PRNGKey(0)
    kx, kp = jax.random.split(key)
    x_nchw = jax.random.normal(kx, (N_IMG, C_IN, H_IN, W_IN), jnp.float32)   # [2,4,16,16]
    params = init_params(kp, C_IN, C1, C2, HID, NCLS)
    packed = pack_params(params)                      # one-time layout/padding repack

    fwd = jax.jit(forward_pallas, static_argnums=(2,))
    logits, run_criterion = fwd(x_nchw, packed, NCLS)
    logits = jax.block_until_ready(logits)

    ref = forward_reference(x_nchw, params)
    err = float(jnp.max(jnp.abs(logits - ref)))
    # Tolerance sized for bf16 MXU operands with f32 accumulation (~1e-2 expected).
    if not (err < 5e-2):
        raise AssertionError(
            f"Pallas forward mismatch vs reference: max|diff|={err}")
    print("KERNEL_OK")
</pallas_src>

<mosaic_0001>
module attributes {stable_mosaic.version = 11 : i64} {
  func.func @_fused_forward_kernel(%arg0: i32, %arg1: memref<1x4x64x128xbf16, #tpu.memory_space<vmem>>, %arg2: memref<128x128xbf16, #tpu.memory_space<vmem>>, %arg3: memref<1x128xf32, #tpu.memory_space<vmem>>, %arg4: memref<9x128x128xbf16, #tpu.memory_space<vmem>>, %arg5: memref<1x128xf32, #tpu.memory_space<vmem>>, %arg6: memref<512x128xbf16, #tpu.memory_space<vmem>>, %arg7: memref<1x128xf32, #tpu.memory_space<vmem>>, %arg8: memref<128x128xbf16, #tpu.memory_space<vmem>>, %arg9: memref<1x128xf32, #tpu.memory_space<vmem>>, %arg10: memref<1x1x128xf32, #tpu.memory_space<vmem>>, %arg11: memref<10x10x128xf32, #tpu.memory_space<vmem>>) attributes {dimension_semantics = [#tpu.dimension_semantics<parallel>], iteration_bounds = array<i64: 2>, scalar_prefetch = 0 : i64, scratch_operands = 1 : i64, tpu.core_type = #tpu.core_type<tc>, window_params = [{transform_indices = @transform_0, window_bounds = array<i64: 1, 4, 64, 128>}, {pipeline_mode = #tpu.pipeline_mode<synchronous>, transform_indices = @transform_1, window_bounds = array<i64: 128, 128>}, {pipeline_mode = #tpu.pipeline_mode<synchronous>, transform_indices = @transform_2, window_bounds = array<i64: 1, 128>}, {pipeline_mode = #tpu.pipeline_mode<synchronous>, transform_indices = @transform_3, window_bounds = array<i64: 9, 128, 128>}, {pipeline_mode = #tpu.pipeline_mode<synchronous>, transform_indices = @transform_4, window_bounds = array<i64: 1, 128>}, {pipeline_mode = #tpu.pipeline_mode<synchronous>, transform_indices = @transform_5, window_bounds = array<i64: 512, 128>}, {pipeline_mode = #tpu.pipeline_mode<synchronous>, transform_indices = @transform_6, window_bounds = array<i64: 1, 128>}, {pipeline_mode = #tpu.pipeline_mode<synchronous>, transform_indices = @transform_7, window_bounds = array<i64: 128, 128>}, {pipeline_mode = #tpu.pipeline_mode<synchronous>, transform_indices = @transform_8, window_bounds = array<i64: 1, 128>}, {transform_indices = @transform_9, window_bounds = array<i64: 1, 1, 128>}]} {
    %c0 = arith.constant 0 : index
    %c0_0 = arith.constant 0 : index
    %0 = vector.load %arg2[%c0, %c0_0] : memref<128x128xbf16, #tpu.memory_space<vmem>>, vector<128x128xbf16>
    %c0_1 = arith.constant 0 : index
    %c0_2 = arith.constant 0 : index
    %c0_3 = arith.constant 0 : index
    %c0_4 = arith.constant 0 : index
    %1 = vector.load %arg1[%c0_1, %c0_2, %c0_3, %c0_4] : memref<1x4x64x128xbf16, #tpu.memory_space<vmem>>, vector<1x1x64x128xbf16>
    %2 = vector.shape_cast %1 : vector<1x1x64x128xbf16> to vector<64x128xbf16>
    %cst = arith.constant dense<0.000000e+00> : vector<64x128xf32>
    %3 = tpu.matmul %2, %0, %cst {dimension_numbers = #tpu.dot_dimension_numbers<[1], [0], [0], [1], [0, 0, 1, 1], [], []>} : vector<64x128xbf16>, vector<128x128xbf16>, vector<64x128xf32> -> vector<64x128xf32>
    %c0_5 = arith.constant 0 : index
    %c1 = arith.constant 1 : index
    %c0_6 = arith.constant 0 : index
    %c0_7 = arith.constant 0 : index
    %4 = vector.load %arg1[%c0_5, %c1, %c0_6, %c0_7] : memref<1x4x64x128xbf16, #tpu.memory_space<vmem>>, vector<1x1x64x128xbf16>
    %5 = vector.shape_cast %4 : vector<1x1x64x128xbf16> to vector<64x128xbf16>
    %cst_8 = arith.constant dense<0.000000e+00> : vector<64x128xf32>
    %6 = tpu.matmul %5, %0, %cst_8 {dimension_numbers = #tpu.dot_dimension_numbers<[1], [0], [0], [1], [0, 0, 1, 1], [], []>} : vector<64x128xbf16>, vector<128x128xbf16>, vector<64x128xf32> -> vector<64x128xf32>
    %7 = arith.maximumf %3, %6 : vector<64x128xf32>
    %c0_9 = arith.constant 0 : index
    %c2 = arith.constant 2 : index
    %c0_10 = arith.constant 0 : index
    %c0_11 = arith.constant 0 : index
    %8 = vector.load %arg1[%c0_9, %c2, %c0_10, %c0_11] : memref<1x4x64x128xbf16, #tpu.memory_space<vmem>>, vector<1x1x64x128xbf16>
    %9 = vector.shape_cast %8 : vector<1x1x64x128xbf16> to vector<64x128xbf16>
    %cst_12 = arith.constant dense<0.000000e+00> : vector<64x128xf32>
    %10 = tpu.matmul %9, %0, %cst_12 {dimension_numbers = #tpu.dot_dimension_numbers<[1], [0], [0], [1], [0, 0, 1, 1], [], []>} : vector<64x128xbf16>, vector<128x128xbf16>, vector<64x128xf32> -> vector<64x128xf32>
    %11 = arith.maximumf %7, %10 : vector<64x128xf32>
    %c0_13 = arith.constant 0 : index
    %c3 = arith.constant 3 : index
    %c0_14 = arith.constant 0 : index
    %c0_15 = arith.constant 0 : index
    %12 = vector.load %arg1[%c0_13, %c3, %c0_14, %c0_15] : memref<1x4x64x128xbf16, #tpu.memory_space<vmem>>, vector<1x1x64x128xbf16>
    %13 = vector.shape_cast %12 : vector<1x1x64x128xbf16> to vector<64x128xbf16>
    %cst_16 = arith.constant dense<0.000000e+00> : vector<64x128xf32>
    %14 = tpu.matmul %13, %0, %cst_16 {dimension_numbers = #tpu.dot_dimension_numbers<[1], [0], [0], [1], [0, 0, 1, 1], [], []>} : vector<64x128xbf16>, vector<128x128xbf16>, vector<64x128xf32> -> vector<64x128xf32>
    %15 = arith.maximumf %11, %14 : vector<64x128xf32>
    %c0_17 = arith.constant 0 : index
    %c0_18 = arith.constant 0 : index
    %16 = vector.load %arg3[%c0_17, %c0_18] : memref<1x128xf32, #tpu.memory_space<vmem>>, vector<1x128xf32>
    %17 = vector.broadcast %16 : vector<1x128xf32> to vector<64x128xf32>
    %18 = arith.addf %15, %17 : vector<64x128xf32>
    %cst_19 = arith.constant 0.000000e+00 : f32
    %19 = vector.broadcast %cst_19 : f32 to vector<64x128xf32>
    %20 = arith.maximumf %18, %19 : vector<64x128xf32>
    %cst_20 = arith.constant 0.000000e+00 : f32
    %21 = vector.broadcast %cst_20 : f32 to vector<10x10x128xf32>
    %c0_21 = arith.constant 0 : index
    %c0_22 = arith.constant 0 : index
    %c0_23 = arith.constant 0 : index
    %22 = vector.load %arg11[%c0_21, %c0_22, %c0_23] : memref<10x10x128xf32, #tpu.memory_space<vmem>>, vector<10x10x128xf32>
    tpu.vector_store %arg11[%c0_21, %c0_22, %c0_23], %21 {strides = array<i32>} : memref<10x10x128xf32, #tpu.memory_space<vmem>>, vector<10x10x128xf32>,
    %23 = vector.shape_cast %20 : vector<64x128xf32> to vector<8x8x128xf32>
    %c1_24 = arith.constant 1 : index
    %c1_25 = arith.constant 1 : index
    %c0_26 = arith.constant 0 : index
    %24 = vector.load %arg11[%c1_24, %c1_25, %c0_26] : memref<10x10x128xf32, #tpu.memory_space<vmem>>, vector<8x8x128xf32>
    tpu.vector_store %arg11[%c1_24, %c1_25, %c0_26], %23 {strides = array<i32>} : memref<10x10x128xf32, #tpu.memory_space<vmem>>, vector<8x8x128xf32>,
    %cst_27 = arith.constant 0.000000e+00 : f32
    %25 = vector.broadcast %cst_27 : f32 to vector<64x128xf32>
    %c0_28 = arith.constant 0 : index
    %c0_29 = arith.constant 0 : index
    %c0_30 = arith.constant 0 : index
    %26 = vector.load %arg11[%c0_28, %c0_29, %c0_30] : memref<10x10x128xf32, #tpu.memory_space<vmem>>, vector<8x8x128xf32>
    %27 = vector.shape_cast %26 : vector<8x8x128xf32> to vector<64x128xf32>
    %28 = arith.truncf %27 : vector<64x128xf32> to vector<64x128xbf16>
    %c0_31 = arith.constant 0 : index
    %c0_32 = arith.constant 0 : index
    %c0_33 = arith.constant 0 : index
    %29 = vector.load %arg4[%c0_31, %c0_32, %c0_33] : memref<9x128x128xbf16, #tpu.memory_space<vmem>>, vector<1x128x128xbf16>
    %30 = vector.shape_cast %29 : vector<1x128x128xbf16> to vector<128x128xbf16>
    %cst_34 = arith.constant dense<0.000000e+00> : vector<64x128xf32>
    %31 = tpu.matmul %28, %30, %cst_34 {dimension_numbers = #tpu.dot_dimension_numbers<[1], [0], [0], [1], [0, 0, 1, 1], [], []>} : vector<64x128xbf16>, vector<128x128xbf16>, vector<64x128xf32> -> vector<64x128xf32>
    %32 = arith.addf %25, %31 : vector<64x128xf32>
    %c0_35 = arith.constant 0 : index
    %c1_36 = arith.constant 1 : index
    %c0_37 = arith.constant 0 : index
    %33 = vector.load %arg11[%c0_35, %c1_36, %c0_37] : memref<10x10x128xf32, #tpu.memory_space<vmem>>, vector<8x8x128xf32>
    %34 = vector.shape_cast %33 : vector<8x8x128xf32> to vector<64x128xf32>
    %35 = arith.truncf %34 : vector<64x128xf32> to vector<64x128xbf16>
    %c1_38 = arith.constant 1 : index
    %c0_39 = arith.constant 0 : index
    %c0_40 = arith.constant 0 : index
    %36 = vector.load %arg4[%c1_38, %c0_39, %c0_40] : memref<9x128x128xbf16, #tpu.memory_space<vmem>>, vector<1x128x128xbf16>
    %37 = vector.shape_cast %36 : vector<1x128x128xbf16> to vector<128x128xbf16>
    %cst_41 = arith.constant dense<0.000000e+00> : vector<64x128xf32>
    %38 = tpu.matmul %35, %37, %cst_41 {dimension_numbers = #tpu.dot_dimension_numbers<[1], [0], [0], [1], [0, 0, 1, 1], [], []>} : vector<64x128xbf16>, vector<128x128xbf16>, vector<64x128xf32> -> vector<64x128xf32>
    %39 = arith.addf %32, %38 : vector<64x128xf32>
    %c0_42 = arith.constant 0 : index
    %c2_43 = arith.constant 2 : index
    %c0_44 = arith.constant 0 : index
    %40 = vector.load %arg11[%c0_42, %c2_43, %c0_44] : memref<10x10x128xf32, #tpu.memory_space<vmem>>, vector<8x8x128xf32>
    %41 = vector.shape_cast %40 : vector<8x8x128xf32> to vector<64x128xf32>
    %42 = arith.truncf %41 : vector<64x128xf32> to vector<64x128xbf16>
    %c2_45 = arith.constant 2 : index
    %c0_46 = arith.constant 0 : index
    %c0_47 = arith.constant 0 : index
    %43 = vector.load %arg4[%c2_45, %c0_46, %c0_47] : memref<9x128x128xbf16, #tpu.memory_space<vmem>>, vector<1x128x128xbf16>
    %44 = vector.shape_cast %43 : vector<1x128x128xbf16> to vector<128x128xbf16>
    %cst_48 = arith.constant dense<0.000000e+00> : vector<64x128xf32>
    %45 = tpu.matmul %42, %44, %cst_48 {dimension_numbers = #tpu.dot_dimension_numbers<[1], [0], [0], [1], [0, 0, 1, 1], [], []>} : vector<64x128xbf16>, vector<128x128xbf16>, vector<64x128xf32> -> vector<64x128xf32>
    %46 = arith.addf %39, %45 : vector<64x128xf32>
    %c1_49 = arith.constant 1 : index
    %c0_50 = arith.constant 0 : index
    %c0_51 = arith.constant 0 : index
    %47 = vector.load %arg11[%c1_49, %c0_50, %c0_51] : memref<10x10x128xf32, #tpu.memory_space<vmem>>, vector<8x8x128xf32>
    %48 = vector.shape_cast %47 : vector<8x8x128xf32> to vector<64x128xf32>
    %49 = arith.truncf %48 : vector<64x128xf32> to vector<64x128xbf16>
    %c3_52 = arith.constant 3 : index
    %c0_53 = arith.constant 0 : index
    %c0_54 = arith.constant 0 : index
    %50 = vector.load %arg4[%c3_52, %c0_53, %c0_54] : memref<9x128x128xbf16, #tpu.memory_space<vmem>>, vector<1x128x128xbf16>
    %51 = vector.shape_cast %50 : vector<1x128x128xbf16> to vector<128x128xbf16>
    %cst_55 = arith.constant dense<0.000000e+00> : vector<64x128xf32>
    %52 = tpu.matmul %49, %51, %cst_55 {dimension_numbers = #tpu.dot_dimension_numbers<[1], [0], [0], [1], [0, 0, 1, 1], [], []>} : vector<64x128xbf16>, vector<128x128xbf16>, vector<64x128xf32> -> vector<64x128xf32>
    %53 = arith.addf %46, %52 : vector<64x128xf32>
    %c1_56 = arith.constant 1 : index
    %c1_57 = arith.constant 1 : index
    %c0_58 = arith.constant 0 : index
    %54 = vector.load %arg11[%c1_56, %c1_57, %c0_58] : memref<10x10x128xf32, #tpu.memory_space<vmem>>, vector<8x8x128xf32>
    %55 = vector.shape_cast %54 : vector<8x8x128xf32> to vector<64x128xf32>
    %56 = arith.truncf %55 : vector<64x128xf32> to vector<64x128xbf16>
    %c4 = arith.constant 4 : index
    %c0_59 = arith.constant 0 : index
    %c0_60 = arith.constant 0 : index
    %57 = vector.load %arg4[%c4, %c0_59, %c0_60] : memref<9x128x128xbf16, #tpu.memory_space<vmem>>, vector<1x128x128xbf16>
    %58 = vector.shape_cast %57 : vector<1x128x128xbf16> to vector<128x128xbf16>
    %cst_61 = arith.constant dense<0.000000e+00> : vector<64x128xf32>
    %59 = tpu.matmul %56, %58, %cst_61 {dimension_numbers = #tpu.dot_dimension_numbers<[1], [0], [0], [1], [0, 0, 1, 1], [], []>} : vector<64x128xbf16>, vector<128x128xbf16>, vector<64x128xf32> -> vector<64x128xf32>
    %60 = arith.addf %53, %59 : vector<64x128xf32>
    %c1_62 = arith.constant 1 : index
    %c2_63 = arith.constant 2 : index
    %c0_64 = arith.constant 0 : index
    %61 = vector.load %arg11[%c1_62, %c2_63, %c0_64] : memref<10x10x128xf32, #tpu.memory_space<vmem>>, vector<8x8x128xf32>
    %62 = vector.shape_cast %61 : vector<8x8x128xf32> to vector<64x128xf32>
    %63 = arith.truncf %62 : vector<64x128xf32> to vector<64x128xbf16>
    %c5 = arith.constant 5 : index
    %c0_65 = arith.constant 0 : index
    %c0_66 = arith.constant 0 : index
    %64 = vector.load %arg4[%c5, %c0_65, %c0_66] : memref<9x128x128xbf16, #tpu.memory_space<vmem>>, vector<1x128x128xbf16>
    %65 = vector.shape_cast %64 : vector<1x128x128xbf16> to vector<128x128xbf16>
    %cst_67 = arith.constant dense<0.000000e+00> : vector<64x128xf32>
    %66 = tpu.matmul %63, %65, %cst_67 {dimension_numbers = #tpu.dot_dimension_numbers<[1], [0], [0], [1], [0, 0, 1, 1], [], []>} : vector<64x128xbf16>, vector<128x128xbf16>, vector<64x128xf32> -> vector<64x128xf32>
    %67 = arith.addf %60, %66 : vector<64x128xf32>
    %c2_68 = arith.constant 2 : index
    %c0_69 = arith.constant 0 : index
    %c0_70 = arith.constant 0 : index
    %68 = vector.load %arg11[%c2_68, %c0_69, %c0_70] : memref<10x10x128xf32, #tpu.memory_space<vmem>>, vector<8x8x128xf32>
    %69 = vector.shape_cast %68 : vector<8x8x128xf32> to vector<64x128xf32>
    %70 = arith.truncf %69 : vector<64x128xf32> to vector<64x128xbf16>
    %c6 = arith.constant 6 : index
    %c0_71 = arith.constant 0 : index
    %c0_72 = arith.constant 0 : index
    %71 = vector.load %arg4[%c6, %c0_71, %c0_72] : memref<9x128x128xbf16, #tpu.memory_space<vmem>>, vector<1x128x128xbf16>
    %72 = vector.shape_cast %71 : vector<1x128x128xbf16> to vector<128x128xbf16>
    %cst_73 = arith.constant dense<0.000000e+00> : vector<64x128xf32>
    %73 = tpu.matmul %70, %72, %cst_73 {dimension_numbers = #tpu.dot_dimension_numbers<[1], [0], [0], [1], [0, 0, 1, 1], [], []>} : vector<64x128xbf16>, vector<128x128xbf16>, vector<64x128xf32> -> vector<64x128xf32>
    %74 = arith.addf %67, %73 : vector<64x128xf32>
    %c2_74 = arith.constant 2 : index
    %c1_75 = arith.constant 1 : index
    %c0_76 = arith.constant 0 : index
    %75 = vector.load %arg11[%c2_74, %c1_75, %c0_76] : memref<10x10x128xf32, #tpu.memory_space<vmem>>, vector<8x8x128xf32>
    %76 = vector.shape_cast %75 : vector<8x8x128xf32> to vector<64x128xf32>
    %77 = arith.truncf %76 : vector<64x128xf32> to vector<64x128xbf16>
    %c7 = arith.constant 7 : index
    %c0_77 = arith.constant 0 : index
    %c0_78 = arith.constant 0 : index
    %78 = vector.load %arg4[%c7, %c0_77, %c0_78] : memref<9x128x128xbf16, #tpu.memory_space<vmem>>, vector<1x128x128xbf16>
    %79 = vector.shape_cast %78 : vector<1x128x128xbf16> to vector<128x128xbf16>
    %cst_79 = arith.constant dense<0.000000e+00> : vector<64x128xf32>
    %80 = tpu.matmul %77, %79, %cst_79 {dimension_numbers = #tpu.dot_dimension_numbers<[1], [0], [0], [1], [0, 0, 1, 1], [], []>} : vector<64x128xbf16>, vector<128x128xbf16>, vector<64x128xf32> -> vector<64x128xf32>
    %81 = arith.addf %74, %80 : vector<64x128xf32>
    %c2_80 = arith.constant 2 : index
    %c2_81 = arith.constant 2 : index
    %c0_82 = arith.constant 0 : index
    %82 = vector.load %arg11[%c2_80, %c2_81, %c0_82] : memref<10x10x128xf32, #tpu.memory_space<vmem>>, vector<8x8x128xf32>
    %83 = vector.shape_cast %82 : vector<8x8x128xf32> to vector<64x128xf32>
    %84 = arith.truncf %83 : vector<64x128xf32> to vector<64x128xbf16>
    %c8 = arith.constant 8 : index
    %c0_83 = arith.constant 0 : index
    %c0_84 = arith.constant 0 : index
    %85 = vector.load %arg4[%c8, %c0_83, %c0_84] : memref<9x128x128xbf16, #tpu.memory_space<vmem>>, vector<1x128x128xbf16>
    %86 = vector.shape_cast %85 : vector<1x128x128xbf16> to vector<128x128xbf16>
    %cst_85 = arith.constant dense<0.000000e+00> : vector<64x128xf32>
    %87 = tpu.matmul %84, %86, %cst_85 {dimension_numbers = #tpu.dot_dimension_numbers<[1], [0], [0], [1], [0, 0, 1, 1], [], []>} : vector<64x128xbf16>, vector<128x128xbf16>, vector<64x128xf32> -> vector<64x128xf32>
    %88 = arith.addf %81, %87 : vector<64x128xf32>
    %c0_86 = arith.constant 0 : index
    %c0_87 = arith.constant 0 : index
    %89 = vector.load %arg5[%c0_86, %c0_87] : memref<1x128xf32, #tpu.memory_space<vmem>>, vector<1x128xf32>
    %90 = vector.broadcast %89 : vector<1x128xf32> to vector<64x128xf32>
    %91 = arith.addf %88, %90 : vector<64x128xf32>
    %cst_88 = arith.constant 0.000000e+00 : f32
    %92 = vector.broadcast %cst_88 : f32 to vector<64x128xf32>
    %93 = arith.maximumf %91, %92 : vector<64x128xf32>
    %94 = vector.extract_strided_slice %93 {offsets = [0, 0], sizes = [8, 128], strides = [1, 1]} : vector<64x128xf32> to vector<8x128xf32>
    %95 = vector.extract_strided_slice %93 {offsets = [8, 0], sizes = [8, 128], strides = [1, 1]} : vector<64x128xf32> to vector<8x128xf32>
    %96 = arith.maximumf %94, %95 : vector<8x128xf32>
    %97 = vector.extract_strided_slice %96 {offsets = [0, 0], sizes = [7, 128], strides = [1, 1]} : vector<8x128xf32> to vector<7x128xf32>
    %98 = vector.extract_strided_slice %96 {offsets = [1, 0], sizes = [7, 128], strides = [1, 1]} : vector<8x128xf32> to vector<7x128xf32>
    %99 = arith.maximumf %97, %98 : vector<7x128xf32>
    %100 = vector.extract_strided_slice %93 {offsets = [16, 0], sizes = [8, 128], strides = [1, 1]} : vector<64x128xf32> to vector<8x128xf32>
    %101 = vector.extract_strided_slice %93 {offsets = [24, 0], sizes = [8, 128], strides = [1, 1]} : vector<64x128xf32> to vector<8x128xf32>
    %102 = arith.maximumf %100, %101 : vector<8x128xf32>
    %103 = vector.extract_strided_slice %102 {offsets = [0, 0], sizes = [7, 128], strides = [1, 1]} : vector<8x128xf32> to vector<7x128xf32>
    %104 = vector.extract_strided_slice %102 {offsets = [1, 0], sizes = [7, 128], strides = [1, 1]} : vector<8x128xf32> to vector<7x128xf32>
    %105 = arith.maximumf %103, %104 : vector<7x128xf32>
    %106 = vector.extract_strided_slice %93 {offsets = [32, 0], sizes = [8, 128], strides = [1, 1]} : vector<64x128xf32> to vector<8x128xf32>
    %107 = vector.extract_strided_slice %93 {offsets = [40, 0], sizes = [8, 128], strides = [1, 1]} : vector<64x128xf32> to vector<8x128xf32>
    %108 = arith.maximumf %106, %107 : vector<8x128xf32>
    %109 = vector.extract_strided_slice %108 {offsets = [0, 0], sizes = [7, 128], strides = [1, 1]} : vector<8x128xf32> to vector<7x128xf32>
    %110 = vector.extract_strided_slice %108 {offsets = [1, 0], sizes = [7, 128], strides = [1, 1]} : vector<8x128xf32> to vector<7x128xf32>
    %111 = arith.maximumf %109, %110 : vector<7x128xf32>
    %112 = vector.extract_strided_slice %93 {offsets = [48, 0], sizes = [8, 128], strides = [1, 1]} : vector<64x128xf32> to vector<8x128xf32>
    %113 = vector.extract_strided_slice %93 {offsets = [56, 0], sizes = [8, 128], strides = [1, 1]} : vector<64x128xf32> to vector<8x128xf32>
    %114 = arith.maximumf %112, %113 : vector<8x128xf32>
    %115 = vector.extract_strided_slice %114 {offsets = [0, 0], sizes = [7, 128], strides = [1, 1]} : vector<8x128xf32> to vector<7x128xf32>
    %116 = vector.extract_strided_slice %114 {offsets = [1, 0], sizes = [7, 128], strides = [1, 1]} : vector<8x128xf32> to vector<7x128xf32>
    %117 = arith.maximumf %115, %116 : vector<7x128xf32>
    %118 = vector.extract_strided_slice %99 {offsets = [0, 0], sizes = [1, 128], strides = [1, 1]} : vector<7x128xf32> to vector<1x128xf32>
    %119 = vector.extract_strided_slice %99 {offsets = [2, 0], sizes = [1, 128], strides = [1, 1]} : vector<7x128xf32> to vector<1x128xf32>
    %120 = arith.addf %118, %119 : vector<1x128xf32>
    %121 = vector.extract_strided_slice %105 {offsets = [0, 0], sizes = [1, 128], strides = [1, 1]} : vector<7x128xf32> to vector<1x128xf32>
    %122 = arith.addf %120, %121 : vector<1x128xf32>
    %123 = vector.extract_strided_slice %105 {offsets = [2, 0], sizes = [1, 128], strides = [1, 1]} : vector<7x128xf32> to vector<1x128xf32>
    %124 = arith.addf %122, %123 : vector<1x128xf32>
    %cst_89 = arith.constant 2.500000e-01 : f32
    %125 = vector.broadcast %cst_89 : f32 to vector<1x128xf32>
    %126 = arith.mulf %125, %124 : vector<1x128xf32>
    %127 = vector.extract_strided_slice %99 {offsets = [4, 0], sizes = [1, 128], strides = [1, 1]} : vector<7x128xf32> to vector<1x128xf32>
    %128 = vector.extract_strided_slice %99 {offsets = [6, 0], sizes = [1, 128], strides = [1, 1]} : vector<7x128xf32> to vector<1x128xf32>
    %129 = arith.addf %127, %128 : vector<1x128xf32>
    %130 = vector.extract_strided_slice %105 {offsets = [4, 0], sizes = [1, 128], strides = [1, 1]} : vector<7x128xf32> to vector<1x128xf32>
    %131 = arith.addf %129, %130 : vector<1x128xf32>
    %132 = vector.extract_strided_slice %105 {offsets = [6, 0], sizes = [1, 128], strides = [1, 1]} : vector<7x128xf32> to vector<1x128xf32>
    %133 = arith.addf %131, %132 : vector<1x128xf32>
    %cst_90 = arith.constant 2.500000e-01 : f32
    %134 = vector.broadcast %cst_90 : f32 to vector<1x128xf32>
    %135 = arith.mulf %134, %133 : vector<1x128xf32>
    %136 = vector.extract_strided_slice %111 {offsets = [0, 0], sizes = [1, 128], strides = [1, 1]} : vector<7x128xf32> to vector<1x128xf32>
    %137 = vector.extract_strided_slice %111 {offsets = [2, 0], sizes = [1, 128], strides = [1, 1]} : vector<7x128xf32> to vector<1x128xf32>
    %138 = arith.addf %136, %137 : vector<1x128xf32>
    %139 = vector.extract_strided_slice %117 {offsets = [0, 0], sizes = [1, 128], strides = [1, 1]} : vector<7x128xf32> to vector<1x128xf32>
    %140 = arith.addf %138, %139 : vector<1x128xf32>
    %141 = vector.extract_strided_slice %117 {offsets = [2, 0], sizes = [1, 128], strides = [1, 1]} : vector<7x128xf32> to vector<1x128xf32>
    %142 = arith.addf %140, %141 : vector<1x128xf32>
    %cst_91 = arith.constant 2.500000e-01 : f32
    %143 = vector.broadcast %cst_91 : f32 to vector<1x128xf32>
    %144 = arith.mulf %143, %142 : vector<1x128xf32>
    %145 = vector.extract_strided_slice %111 {offsets = [4, 0], sizes = [1, 128], strides = [1, 1]} : vector<7x128xf32> to vector<1x128xf32>
    %146 = vector.extract_strided_slice %111 {offsets = [6, 0], sizes = [1, 128], strides = [1, 1]} : vector<7x128xf32> to vector<1x128xf32>
    %147 = arith.addf %145, %146 : vector<1x128xf32>
    %148 = vector.extract_strided_slice %117 {offsets = [4, 0], sizes = [1, 128], strides = [1, 1]} : vector<7x128xf32> to vector<1x128xf32>
    %149 = arith.addf %147, %148 : vector<1x128xf32>
    %150 = vector.extract_strided_slice %117 {offsets = [6, 0], sizes = [1, 128], strides = [1, 1]} : vector<7x128xf32> to vector<1x128xf32>
    %151 = arith.addf %149, %150 : vector<1x128xf32>
    %cst_92 = arith.constant 2.500000e-01 : f32
    %152 = vector.broadcast %cst_92 : f32 to vector<1x128xf32>
    %153 = arith.mulf %152, %151 : vector<1x128xf32>
    %154 = tpu.concatenate %126, %135, %144, %153 in 1 : vector<1x128xf32>, vector<1x128xf32>, vector<1x128xf32>, vector<1x128xf32> -> vector<1x512xf32>
    %155 = arith.truncf %154 : vector<1x512xf32> to vector<1x512xbf16>
    %c0_93 = arith.constant 0 : index
    %c0_94 = arith.constant 0 : index
    %156 = vector.load %arg6[%c0_93, %c0_94] : memref<512x128xbf16, #tpu.memory_space<vmem>>, vector<512x128xbf16>
    %cst_95 = arith.constant dense<0.000000e+00> : vector<1x128xf32>
    %157 = tpu.matmul %155, %156, %cst_95 {dimension_numbers = #tpu.dot_dimension_numbers<[1], [0], [0], [1], [0, 0, 1, 1], [], []>} : vector<1x512xbf16>, vector<512x128xbf16>, vector<1x128xf32> -> vector<1x128xf32>
    %c0_96 = arith.constant 0 : index
    %c0_97 = arith.constant 0 : index
    %158 = vector.load %arg7[%c0_96, %c0_97] : memref<1x128xf32, #tpu.memory_space<vmem>>, vector<1x128xf32>
    %159 = arith.addf %157, %158 : vector<1x128xf32>
    %cst_98 = arith.constant 0.000000e+00 : f32
    %160 = vector.broadcast %cst_98 : f32 to vector<1x128xf32>
    %161 = arith.maximumf %159, %160 : vector<1x128xf32>
    %162 = arith.truncf %161 : vector<1x128xf32> to vector<1x128xbf16>
    %c0_99 = arith.constant 0 : index
    %c0_100 = arith.constant 0 : index
    %163 = vector.load %arg8[%c0_99, %c0_100] : memref<128x128xbf16, #tpu.memory_space<vmem>>, vector<128x128xbf16>
    %cst_101 = arith.constant dense<0.000000e+00> : vector<1x128xf32>
    %164 = tpu.matmul %162, %163, %cst_101 {dimension_numbers = #tpu.dot_dimension_numbers<[1], [0], [0], [1], [0, 0, 1, 1], [], []>} : vector<1x128xbf16>, vector<128x128xbf16>, vector<1x128xf32> -> vector<1x128xf32>
    %c0_102 = arith.constant 0 : index
    %c0_103 = arith.constant 0 : index
    %165 = vector.load %arg9[%c0_102, %c0_103] : memref<1x128xf32, #tpu.memory_space<vmem>>, vector<1x128xf32>
    %166 = arith.addf %164, %165 : vector<1x128xf32>
    %167 = vector.shape_cast %166 : vector<1x128xf32> to vector<1x1x128xf32>
    %c0_104 = arith.constant 0 : index
    %c0_105 = arith.constant 0 : index
    %c0_106 = arith.constant 0 : index
    %168 = vector.load %arg10[%c0_104, %c0_105, %c0_106] : memref<1x1x128xf32, #tpu.memory_space<vmem>>, vector<1x1x128xf32>
    tpu.vector_store %arg10[%c0_104, %c0_105, %c0_106], %167 {strides = array<i32>} : memref<1x1x128xf32, #tpu.memory_space<vmem>>, vector<1x1x128xf32>,
    return
  }
  func.func @transform_0(%arg0: i32) -> (i32, i32, i32, i32) {
    %c0_i32 = arith.constant 0 : i32
    %c0_i32_0 = arith.constant 0 : i32
    %c0_i32_1 = arith.constant 0 : i32
    %c0_i32_2 = arith.constant 0 : i32
    return %arg0, %c0_i32, %c0_i32_0, %c0_i32_1 : i32, i32, i32, i32
  }
  func.func @transform_1(%arg0: i32) -> (i32, i32) {
    %c0_i32 = arith.constant 0 : i32
    %c0_i32_0 = arith.constant 0 : i32
    %c0_i32_1 = arith.constant 0 : i32
    return %c0_i32, %c0_i32_0 : i32, i32
  }
  func.func @transform_2(%arg0: i32) -> (i32, i32) {
    %c0_i32 = arith.constant 0 : i32
    %c0_i32_0 = arith.constant 0 : i32
    %c0_i32_1 = arith.constant 0 : i32
    return %c0_i32, %c0_i32_0 : i32, i32
  }
  func.func @transform_3(%arg0: i32) -> (i32, i32, i32) {
    %c0_i32 = arith.constant 0 : i32
    %c0_i32_0 = arith.constant 0 : i32
    %c0_i32_1 = arith.constant 0 : i32
    %c0_i32_2 = arith.constant 0 : i32
    return %c0_i32, %c0_i32_0, %c0_i32_1 : i32, i32, i32
  }
  func.func @transform_4(%arg0: i32) -> (i32, i32) {
    %c0_i32 = arith.constant 0 : i32
    %c0_i32_0 = arith.constant 0 : i32
    %c0_i32_1 = arith.constant 0 : i32
    return %c0_i32, %c0_i32_0 : i32, i32
  }
  func.func @transform_5(%arg0: i32) -> (i32, i32) {
    %c0_i32 = arith.constant 0 : i32
    %c0_i32_0 = arith.constant 0 : i32
    %c0_i32_1 = arith.constant 0 : i32
    return %c0_i32, %c0_i32_0 : i32, i32
  }
  func.func @transform_6(%arg0: i32) -> (i32, i32) {
    %c0_i32 = arith.constant 0 : i32
    %c0_i32_0 = arith.constant 0 : i32
    %c0_i32_1 = arith.constant 0 : i32
    return %c0_i32, %c0_i32_0 : i32, i32
  }
  func.func @transform_7(%arg0: i32) -> (i32, i32) {
    %c0_i32 = arith.constant 0 : i32
    %c0_i32_0 = arith.constant 0 : i32
    %c0_i32_1 = arith.constant 0 : i32
    return %c0_i32, %c0_i32_0 : i32, i32
  }
  func.func @transform_8(%arg0: i32) -> (i32, i32) {
    %c0_i32 = arith.constant 0 : i32
    %c0_i32_0 = arith.constant 0 : i32
    %c0_i32_1 = arith.constant 0 : i32
    return %c0_i32, %c0_i32_0 : i32, i32
  }
  func.func @transform_9(%arg0: i32) -> (i32, i32, i32) {
    %c0_i32 = arith.constant 0 : i32
    %c0_i32_0 = arith.constant 0 : i32
    %c0_i32_1 = arith.constant 0 : i32
    return %arg0, %c0_i32, %c0_i32_0 : i32, i32, i32
  }
}

</mosaic_0001>

<llo_original>
// kernel: forward_pallas.1
$region0: #{forward_pallas.1}
  #allocation0 [shape = 'u32[]', space=smem, size = 0x4, offset = 0x4, fixed_abs, tag = 'smem constant byte address 0x4 - core index']
  #allocation1 [shape = 'u32[72,128]{1,0:T(1,128)}', space=vmem, size = 0x9000, scoped, tag = 'internal scratch']
  #allocation2 [shape = 'f32[10,10,128]{2,1,0:T(8,128)}', space=vmem, size = 0x14000, scoped, tag = 'scratch operand']
  %s0 = inlined_call_operand.vmem [shape: bf16[2,4,64,128], index: 0, kind: input, shape index: {}]
  %s1 = inlined_call_operand.vmem [shape: bf16[128,128], index: 1, kind: input, shape index: {}]
  %s2 = inlined_call_operand.vmem [shape: f32[1,128], index: 2, kind: input, shape index: {}]
  %s3 = inlined_call_operand.vmem [shape: bf16[9,128,128], index: 3, kind: input, shape index: {}]
  %s4 = inlined_call_operand.vmem [shape: f32[1,128], index: 4, kind: input, shape index: {}]
  %s5 = inlined_call_operand.vmem [shape: bf16[512,128], index: 5, kind: input, shape index: {}]
  %s6 = inlined_call_operand.vmem [shape: f32[1,128], index: 6, kind: input, shape index: {}]
  %s7 = inlined_call_operand.vmem [shape: bf16[128,128], index: 7, kind: input, shape index: {}]
  %s8 = inlined_call_operand.vmem [shape: f32[1,128], index: 8, kind: input, shape index: {}]
  %s9 = inlined_call_operand.hbm [shape: f32[2,1,128], index: 9, kind: output, shape index: {}]
  %s10 = sld [smem:[#allocation0]]
  $region69: #{forward_pallas.1} parent=0
    _
  %s12 = ssub.s32 1, %s10
  %s13 = scalar_select 0, %s12, %s10
  $region1: #{forward_pallas.1} parent=0
    #allocation3 [shape = 'u8[1024]{0}', space=vmem, size = 0x400, scoped, tag = 'output window, operand 0']
    #allocation4 [shape = 's32[2]{0}', space=sflag, size = 0x8, scoped, tag = 'scoped memory for forward_pallas.1']
    %14 = vsyncpa [#allocation4], 0
    %s15 = scalar_lea.sflag [#allocation4], 1
    %16 = vsyncpa %s15, 0
    loop: start=0, step=1, limit=4
    $region2: #{forward_pallas.1} parent=1 // loop_pre_header
      _
    $region3: #{forward_pallas.1} parent=1 // loop_header
      %s18 = sphi 0, %s22
      %p19 = scmp.ge.s32.totalorder %s18, 4
      %s28 = sphi 0, %s30
      %s31 = sphi 0, %s28
      %s32 = sphi 0, %s31
      %s48 = sphi 0, %s32
      %s52 = sphi 0, %s52
      %s54 = sphi 0, %s52
      %s55 = sphi 0, %s54
      %s69 = sphi 0, %s55
      %s73 = sphi 0, %s73
      %s75 = sphi 0, %s73
      %s76 = sphi 0, %s75
      %s90 = sphi 0, %s76
      %s94 = sphi 0, %s94
      %s96 = sphi 0, %s94
      %s97 = sphi 0, %s96
      %s111 = sphi 0, %s97
      %s115 = sphi 0, %s115
      %s117 = sphi 0, %s115
      %s118 = sphi 0, %s117
      %s132 = sphi 0, %s118
      %s136 = sphi 0, %s136
      %s138 = sphi 0, %s136
      %s139 = sphi 0, %s138
      %s153 = sphi 0, %s139
      %s157 = sphi 0, %s157
      %s159 = sphi 0, %s157
      %s160 = sphi 0, %s159
      %s174 = sphi 0, %s160
      %s178 = sphi 0, %s178
      %s180 = sphi 0, %s178
      %s181 = sphi 0, %s180
      %s195 = sphi 0, %s181
      %s199 = sphi 0, %s199
      %s201 = sphi 0, %s199
      %s202 = sphi 0, %s201
      %s216 = sphi 0, %s202
      %s222 = sphi 0, %s224
      %s225 = sphi 0, %s222
      %s226 = sphi 0, %s225
      %s242 = sphi 0, %s226
    $region4: #{forward_pallas.1} parent=1 // loop_header_branch
      %21 = sbr.rel (%p19) target = $region8
    $region5: #{forward_pallas.1} parent=1 // loop_body
      %s23 = ssub.s32 %s18, 1
      %s24 = ssub.s32 %s18, 2
      %s25 = sadd.s32 %s18, 1
      %s26 = ssub.s32 %s18, %s25
      %p27 = scmp.eq.s32.totalorder %s26, 0
      %s29 = sadd.s32 %s28, 1
      %s30 = scalar_select %p27, %s28, %s29
      %p33 = pneg %p27
      %p34 = scmp.eq.s32.totalorder %s18, 1
      %p35 = por %p33, %p34
      %p36 = scmp.ne.s32.totalorder %s28, %s31
      %p37 = scmp.eq.s32.totalorder %s18, 0
      %p38 = por %p36, %p37
      %p39 = scmp.ne.s32.totalorder %s28, %s31
      %p40 = scmp.eq.s32.totalorder %s23, 1
      %p41 = por %p39, %p40
      %p42 = scmp.ne.s32.totalorder %s31, %s32
      %p43 = scmp.eq.s32.totalorder %s23, 0
      %p44 = por %p42, %p43
      %p45 = scmp.ne.s32.totalorder %s31, %s32
      %p46 = scmp.eq.s32.totalorder %s24, 1
      %p47 = por %p45, %p46
      %p49 = scmp.ne.s32.totalorder %s32, %s48
      %p50 = scmp.eq.s32.totalorder %s24, 0
      %p51 = por %p49, %p50
      %s53 = sadd.s32 %s52, 1
      %p56 = scmp.eq.s32.totalorder %s18, 1
      %p57 = scmp.ne.s32.totalorder %s52, %s54
      %p58 = scmp.eq.s32.totalorder %s18, 0
      %p59 = por %p57, %p58
      %p60 = scmp.ne.s32.totalorder %s52, %s54
      %p61 = scmp.eq.s32.totalorder %s23, 1
      %p62 = por %p60, %p61
      %p63 = scmp.ne.s32.totalorder %s54, %s55
      %p64 = scmp.eq.s32.totalorder %s23, 0
      %p65 = por %p63, %p64
      %p66 = scmp.ne.s32.totalorder %s54, %s55
      %p67 = scmp.eq.s32.totalorder %s24, 1
      %p68 = por %p66, %p67
      %p70 = scmp.ne.s32.totalorder %s55, %s69
      %p71 = scmp.eq.s32.totalorder %s24, 0
      %p72 = por %p70, %p71
      %s74 = sadd.s32 %s73, 1
      %p77 = scmp.eq.s32.totalorder %s18, 1
      %p78 = scmp.ne.s32.totalorder %s73, %s75
      %p79 = scmp.eq.s32.totalorder %s18, 0
      %p80 = por %p78, %p79
      %p81 = scmp.ne.s32.totalorder %s73, %s75
      %p82 = scmp.eq.s32.totalorder %s23, 1
      %p83 = por %p81, %p82
      %p84 = scmp.ne.s32.totalorder %s75, %s76
      %p85 = scmp.eq.s32.totalorder %s23, 0
      %p86 = por %p84, %p85
      %p87 = scmp.ne.s32.totalorder %s75, %s76
      %p88 = scmp.eq.s32.totalorder %s24, 1
      %p89 = por %p87, %p88
      %p91 = scmp.ne.s32.totalorder %s76, %s90
      %p92 = scmp.eq.s32.totalorder %s24, 0
      %p93 = por %p91, %p92
      %s95 = sadd.s32 %s94, 1
      %p98 = scmp.eq.s32.totalorder %s18, 1
      %p99 = scmp.ne.s32.totalorder %s94, %s96
      %p100 = scmp.eq.s32.totalorder %s18, 0
      %p101 = por %p99, %p100
      %p102 = scmp.ne.s32.totalorder %s94, %s96
      %p103 = scmp.eq.s32.totalorder %s23, 1
      %p104 = por %p102, %p103
      %p105 = scmp.ne.s32.totalorder %s96, %s97
      %p106 = scmp.eq.s32.totalorder %s23, 0
      %p107 = por %p105, %p106
      %p108 = scmp.ne.s32.totalorder %s96, %s97
      %p109 = scmp.eq.s32.totalorder %s24, 1
      %p110 = por %p108, %p109
      %p112 = scmp.ne.s32.totalorder %s97, %s111
      %p113 = scmp.eq.s32.totalorder %s24, 0
      %p114 = por %p112, %p113
      %s116 = sadd.s32 %s115, 1
      %p119 = scmp.eq.s32.totalorder %s18, 1
      %p120 = scmp.ne.s32.totalorder %s115, %s117
      %p121 = scmp.eq.s32.totalorder %s18, 0
      %p122 = por %p120, %p121
      %p123 = scmp.ne.s32.totalorder %s115, %s117
      %p124 = scmp.eq.s32.totalorder %s23, 1
      %p125 = por %p123, %p124
      %p126 = scmp.ne.s32.totalorder %s117, %s118
      %p127 = scmp.eq.s32.totalorder %s23, 0
      %p128 = por %p126, %p127
      %p129 = scmp.ne.s32.totalorder %s117, %s118
      %p130 = scmp.eq.s32.totalorder %s24, 1
      %p131 = por %p129, %p130
      %p133 = scmp.ne.s32.totalorder %s118, %s132
      %p134 = scmp.eq.s32.totalorder %s24, 0
      %p135 = por %p133, %p134
      %s137 = sadd.s32 %s136, 1
      %p140 = scmp.eq.s32.totalorder %s18, 1
      %p141 = scmp.ne.s32.totalorder %s136, %s138
      %p142 = scmp.eq.s32.totalorder %s18, 0
      %p143 = por %p141, %p142
      %p144 = scmp.ne.s32.totalorder %s136, %s138
      %p145 = scmp.eq.s32.totalorder %s23, 1
      %p146 = por %p144, %p145
      %p147 = scmp.ne.s32.totalorder %s138, %s139
      %p148 = scmp.eq.s32.totalorder %s23, 0
      %p149 = por %p147, %p148
      %p150 = scmp.ne.s32.totalorder %s138, %s139
      %p151 = scmp.eq.s32.totalorder %s24, 1
      %p152 = por %p150, %p151
      %p154 = scmp.ne.s32.totalorder %s139, %s153
      %p155 = scmp.eq.s32.totalorder %s24, 0
      %p156 = por %p154, %p155
      %s158 = sadd.s32 %s157, 1
      %p161 = scmp.eq.s32.totalorder %s18, 1
      %p162 = scmp.ne.s32.totalorder %s157, %s159
      %p163 = scmp.eq.s32.totalorder %s18, 0
      %p164 = por %p162, %p163
      %p165 = scmp.ne.s32.totalorder %s157, %s159
      %p166 = scmp.eq.s32.totalorder %s23, 1
      %p167 = por %p165, %p166
      %p168 = scmp.ne.s32.totalorder %s159, %s160
      %p169 = scmp.eq.s32.totalorder %s23, 0
      %p170 = por %p168, %p169
      %p171 = scmp.ne.s32.totalorder %s159, %s160
      %p172 = scmp.eq.s32.totalorder %s24, 1
      %p173 = por %p171, %p172
      %p175 = scmp.ne.s32.totalorder %s160, %s174
      %p176 = scmp.eq.s32.totalorder %s24, 0
      %p177 = por %p175, %p176
      %s179 = sadd.s32 %s178, 1
      %p182 = scmp.eq.s32.totalorder %s18, 1
      %p183 = scmp.ne.s32.totalorder %s178, %s180
      %p184 = scmp.eq.s32.totalorder %s18, 0
      %p185 = por %p183, %p184
      %p186 = scmp.ne.s32.totalorder %s178, %s180
      %p187 = scmp.eq.s32.totalorder %s23, 1
      %p188 = por %p186, %p187
      %p189 = scmp.ne.s32.totalorder %s180, %s181
      %p190 = scmp.eq.s32.totalorder %s23, 0
      %p191 = por %p189, %p190
      %p192 = scmp.ne.s32.totalorder %s180, %s181
      %p193 = scmp.eq.s32.totalorder %s24, 1
      %p194 = por %p192, %p193
      %p196 = scmp.ne.s32.totalorder %s181, %s195
      %p197 = scmp.eq.s32.totalorder %s24, 0
      %p198 = por %p196, %p197
      %s200 = sadd.s32 %s199, 1
      %p203 = scmp.eq.s32.totalorder %s18, 1
      %p204 = scmp.ne.s32.totalorder %s199, %s201
      %p205 = scmp.eq.s32.totalorder %s18, 0
      %p206 = por %p204, %p205
      %p207 = scmp.ne.s32.totalorder %s199, %s201
      %p208 = scmp.eq.s32.totalorder %s23, 1
      %p209 = por %p207, %p208
      %p210 = scmp.ne.s32.totalorder %s201, %s202
      %p211 = scmp.eq.s32.totalorder %s23, 0
      %p212 = por %p210, %p211
      %p213 = scmp.ne.s32.totalorder %s201, %s202
      %p214 = scmp.eq.s32.totalorder %s24, 1
      %p215 = por %p213, %p214
      %p217 = scmp.ne.s32.totalorder %s202, %s216
      %p218 = scmp.eq.s32.totalorder %s24, 0
      %p219 = por %p217, %p218
      %s220 = ssub.s32 %s18, %s25
      %p221 = scmp.eq.s32.totalorder %s220, 0
      %s223 = sadd.s32 %s222, 1
      %s224 = scalar_select %p221, %s222, %s223
      %p227 = pneg %p221
      %p228 = scmp.eq.s32.totalorder %s18, 1
      %p229 = por %p227, %p228
      %p230 = scmp.ne.s32.totalorder %s222, %s225
      %p231 = scmp.eq.s32.totalorder %s18, 0
      %p232 = por %p230, %p231
      %p233 = scmp.ne.s32.totalorder %s222, %s225
      %p234 = scmp.eq.s32.totalorder %s23, 1
      %p235 = por %p233, %p234
      %p236 = scmp.ne.s32.totalorder %s225, %s226
      %p237 = scmp.eq.s32.totalorder %s23, 0
      %p238 = por %p236, %p237
      %p239 = scmp.ne.s32.totalorder %s225, %s226
      %p240 = scmp.eq.s32.totalorder %s24, 1
      %p241 = por %p239, %p240
      %p243 = scmp.ne.s32.totalorder %s226, %s242
      %p244 = scmp.eq.s32.totalorder %s24, 0
      %p245 = por %p243, %p244
      %p246 = scmp.le.s32.totalorder 1, %s18
      %p247 = scmp.lt.s32.totalorder %s18, 3
      %p248 = pnand %p246, %p247
      %p249 = pneg %p248
      // Predicated region
      $region9: #{forward_pallas.1} parent=5 // pred_check
        _
      $region10: #{forward_pallas.1} parent=5 // pred_check_branch
        %251 = sbr.rel (%p248) target = $region12
      $region11: #{forward_pallas.1} parent=5 // pred_region
        %s252 = ssub.s32 %s18, 1
        // Predicated region
        $region13: #{forward_pallas.1} parent=11 // pred_check
          %p253 = pneg %p65
        $region14: #{forward_pallas.1} parent=11 // pred_check_branch
          %255 = sbr.rel (%p253) target = $region16
        $region15: #{forward_pallas.1} parent=11 // pred_region
          _
        $region16: #{forward_pallas.1} parent=11 // pred_fallthru
          _
        // Predicated region
        $region17: #{forward_pallas.1} parent=11 // pred_check
          %p256 = pneg %p86
        $region18: #{forward_pallas.1} parent=11 // pred_check_branch
          %258 = sbr.rel (%p256) target = $region20
        $region19: #{forward_pallas.1} parent=11 // pred_region
          _
        $region20: #{forward_pallas.1} parent=11 // pred_fallthru
          _
        // Predicated region
        $region21: #{forward_pallas.1} parent=11 // pred_check
          %p259 = pneg %p107
        $region22: #{forward_pallas.1} parent=11 // pred_check_branch
          %261 = sbr.rel (%p259) target = $region24
        $region23: #{forward_pallas.1} parent=11 // pred_region
          _
        $region24: #{forward_pallas.1} parent=11 // pred_fallthru
          _
        // Predicated region
        $region25: #{forward_pallas.1} parent=11 // pred_check
          %p262 = pneg %p128
        $region26: #{forward_pallas.1} parent=11 // pred_check_branch
          %264 = sbr.rel (%p262) target = $region28
        $region27: #{forward_pallas.1} parent=11 // pred_region
          _
        $region28: #{forward_pallas.1} parent=11 // pred_fallthru
          _
        // Predicated region
        $region29: #{forward_pallas.1} parent=11 // pred_check
          %p265 = pneg %p149
        $region30: #{forward_pallas.1} parent=11 // pred_check_branch
          %267 = sbr.rel (%p265) target = $region32
        $region31: #{forward_pallas.1} parent=11 // pred_region
          _
        $region32: #{forward_pallas.1} parent=11 // pred_fallthru
          _
        // Predicated region
        $region33: #{forward_pallas.1} parent=11 // pred_check
          %p268 = pneg %p170
        $region34: #{forward_pallas.1} parent=11 // pred_check_branch
          %270 = sbr.rel (%p268) target = $region36
        $region35: #{forward_pallas.1} parent=11 // pred_region
          _
        $region36: #{forward_pallas.1} parent=11 // pred_fallthru
          _
        // Predicated region
        $region37: #{forward_pallas.1} parent=11 // pred_check
          %p271 = pneg %p191
        $region38: #{forward_pallas.1} parent=11 // pred_check_branch
          %273 = sbr.rel (%p271) target = $region40
        $region39: #{forward_pallas.1} parent=11 // pred_region
          _
        $region40: #{forward_pallas.1} parent=11 // pred_fallthru
          _
        // Predicated region
        $region41: #{forward_pallas.1} parent=11 // pred_check
          %p274 = pneg %p212
        $region42: #{forward_pallas.1} parent=11 // pred_check_branch
          %276 = sbr.rel (%p274) target = $region44
        $region43: #{forward_pallas.1} parent=11 // pred_region
          _
        $region44: #{forward_pallas.1} parent=11 // pred_fallthru
          _
      $region12: #{forward_pallas.1} parent=5 // pred_fallthru
        _
      %p277 = scmp.lt.s32.totalorder %s18, 2
      // Predicated region
      $region45: #{forward_pallas.1} parent=5 // pred_check
        %p278 = pneg %p277
      $region46: #{forward_pallas.1} parent=5 // pred_check_branch
        %280 = sbr.rel (%p278) target = $region48
      $region47: #{forward_pallas.1} parent=5 // pred_region
        // Predicated region
        $region49: #{forward_pallas.1} parent=47 // pred_check
          %p281 = pneg %p38
        $region50: #{forward_pallas.1} parent=47 // pred_check_branch
          %283 = sbr.rel (%p281) target = $region52
        $region51: #{forward_pallas.1} parent=47 // pred_region
          %p284 = scmp.lt.s32.totalorder %s18, 1
          %s285 = scalar_select %p284, %s18, 1
          %s286 = smul.addr %s285, 32
          %s287 = smul.addr %s286, 4
          %s288 = scalar_lea.vmem %s0, %s287
        $region52: #{forward_pallas.1} parent=47 // pred_fallthru
          _
      $region48: #{forward_pallas.1} parent=5 // pred_fallthru
        _
      %p289 = scmp.le.s32.totalorder 1, %s18
      %p290 = scmp.lt.s32.totalorder %s18, 3
      %p291 = pnand %p289, %p290
      %p292 = pneg %p291
      // Predicated region
      $region53: #{forward_pallas.1} parent=5 // pred_check
        _
      $region54: #{forward_pallas.1} parent=5 // pred_check_branch
        %294 = sbr.rel (%p291) target = $region56
      $region55: #{forward_pallas.1} parent=5 // pred_region
        %s295 = ssub.s32 %s18, 1
        %p296 = scmp.lt.s32.totalorder %s23, 1
        %s297 = scalar_select %p296, %s23, 1
        %s298 = smul.addr %s297, 32
        %s299 = smul.addr %s298, 4
        %s300 = scalar_lea.vmem %s0, %s299
        %p301 = pneg %p44
        %p302 = pneg %p41
        %p303 = pneg %p65
        %p304 = pneg %p62
        %p305 = pneg %p86
        %p306 = pneg %p83
        %p307 = pneg %p107
        %p308 = pneg %p104
        %p309 = pneg %p128
        %p310 = pneg %p125
        %p311 = pneg %p149
        %p312 = pneg %p146
        %p313 = pneg %p170
        %p314 = pneg %p167
        %p315 = pneg %p191
        %p316 = pneg %p188
        %p317 = pneg %p212
        %p318 = pneg %p209
        %p319 = pneg %p238
        %p320 = pneg %p235
        %s321 = sand.u32 %s225, 1
        %s322 = scalar_lea.sflag [#allocation4], %s321
        %s323 = sand.u32 %s225, 1
        %s324 = scalar_lea.vmem [#allocation3], %s323
        %p325 = scmp.lt.s32.totalorder %s23, 1
        %s326 = scalar_select %p325, %s23, 1
        %s327 = smul.addr %s326, 32
        %s328 = smul.addr %s327, 4
        %s329 = scalar_lea.vmem %s0, %s328
        %v330 = vld [vmem:[%s1] sm:$0xf]
        %v331 = vld [vmem:[%s1 + $0x4] sm:$0xf]
        %v332 = vld [vmem:[%s1 + $0x8] sm:$0xf]
        %v333 = vld [vmem:[%s1 + $0xc] sm:$0xf]
        %v334 = vld [vmem:[%s1 + $0x10] sm:$0xf]
        %v335 = vld [vmem:[%s1 + $0x14] sm:$0xf]
        %v336 = vld [vmem:[%s1 + $0x18] sm:$0xf]
        %v337 = vld [vmem:[%s1 + $0x1c] sm:$0xf]
        %v338 = vld [vmem:[%s1 + $0x20] sm:$0xf]
        %v339 = vld [vmem:[%s1 + $0x24] sm:$0xf]
        %v340 = vld [vmem:[%s1 + $0x28] sm:$0xf]
        %v341 = vld [vmem:[%s1 + $0x2c] sm:$0xf]
        %v342 = vld [vmem:[%s1 + $0x30] sm:$0xf]
        %v343 = vld [vmem:[%s1 + $0x34] sm:$0xf]
        %v344 = vld [vmem:[%s1 + $0x38] sm:$0xf]
        %v345 = vld [vmem:[%s1 + $0x3c] sm:$0xf]
        %v346 = vld [vmem:[%s329] sm:$0xf]
        %v347 = vld [vmem:[%s329 + $0x4] sm:$0xf]
        %v348 = vld [vmem:[%s329 + $0x8] sm:$0xf]
        %v349 = vld [vmem:[%s329 + $0xc] sm:$0xf]
        %v350 = vld [vmem:[%s329 + $0x10] sm:$0xf]
        %v351 = vld [vmem:[%s329 + $0x14] sm:$0xf]
        %v352 = vld [vmem:[%s329 + $0x18] sm:$0xf]
        %v353 = vld [vmem:[%s329 + $0x1c] sm:$0xf]
        %v362 = vunpack.c.l.b16 %v346
        %v363 = vunpack.c.l.b16 %v347
        %v364 = vunpack.c.l.b16 %v348
        %v365 = vunpack.c.l.b16 %v349
        %v366 = vunpack.c.l.b16 %v350
        %v367 = vunpack.c.l.b16 %v351
        %v368 = vunpack.c.l.b16 %v352
        %v369 = vunpack.c.l.b16 %v353
        %v370 = vpack.c.b16 %v363, %v362
        %v371 = vpack.c.b16 %v365, %v364
        %v372 = vpack.c.b16 %v367, %v366
        %v373 = vpack.c.b16 %v369, %v368
        %v394 = vunpack.c.l.b16 %v330
        %v395 = vunpack.c.l.b16 %v331
        %v396 = vunpack.c.l.b16 %v332
        %v397 = vunpack.c.l.b16 %v333
        %v398 = vunpack.c.l.b16 %v334
        %v399 = vunpack.c.l.b16 %v335
        %v400 = vunpack.c.l.b16 %v336
        %v401 = vunpack.c.l.b16 %v337
        %v402 = vunpack.c.l.b16 %v338
        %v403 = vunpack.c.l.b16 %v339
        %v404 = vunpack.c.l.b16 %v340
        %v405 = vunpack.c.l.b16 %v341
        %v406 = vunpack.c.l.b16 %v342
        %v407 = vunpack.c.l.b16 %v343
        %v408 = vunpack.c.l.b16 %v344
        %v409 = vunpack.c.l.b16 %v345
        %v410 = vpack.c.b16 %v395, %v394
        %v411 = vpack.c.b16 %v397, %v396
        %v412 = vpack.c.b16 %v399, %v398
        %v413 = vpack.c.b16 %v401, %v400
        %v414 = vpack.c.b16 %v403, %v402
        %v415 = vpack.c.b16 %v405, %v404
        %v416 = vpack.c.b16 %v407, %v406
        %v417 = vpack.c.b16 %v409, %v408
        %426 = vmatpush.bf16.msra.mxu0 %v417
        %427 = vmatpush.bf16.msra.mxu0 %v416
        %428 = vmatpush.bf16.msra.mxu0 %v415
        %429 = vmatpush.bf16.msra.mxu0 %v414
        %430 = vmatpush.bf16.msra.mxu0 %v413
        %431 = vmatpush.bf16.msra.mxu0 %v412
        %432 = vmatpush.bf16.msra.mxu0 %v411
        %433 = vmatpush.bf16.msra.mxu0 %v410
        %434 = vmatmul.bf16.gmra.mxu0 %v370
        %v435 = vpop.f32.mrf.mxu0
        %v436 = vadd.f32 0.0, %v435
        %v437 = vpop.f32.mrf.mxu0
        %v438 = vadd.f32 0.0, %v437
        %439 = vmatmul.bf16.gmra.mxu0 %v371
        %v440 = vpop.f32.mrf.mxu0
        %v441 = vadd.f32 0.0, %v440
        %v442 = vpop.f32.mrf.mxu0
        %v443 = vadd.f32 0.0, %v442
        %444 = vmatmul.bf16.gmra.mxu0 %v372
        %v445 = vpop.f32.mrf.mxu0
        %v446 = vadd.f32 0.0, %v445
        %v447 = vpop.f32.mrf.mxu0
        %v448 = vadd.f32 0.0, %v447
        %449 = vmatmul.bf16.gmra.mxu0 %v373
        %v450 = vpop.f32.mrf.mxu0
        %v451 = vadd.f32 0.0, %v450
        %v452 = vpop.f32.mrf.mxu0
        %v453 = vadd.f32 0.0, %v452
        %454 = vdwg.mxu0
        %s455 = scalar_lea.vmem %s329, 32
        %v456 = vld [vmem:[%s455] sm:$0xf]
        %v457 = vld [vmem:[%s455 + $0x4] sm:$0xf]
        %v458 = vld [vmem:[%s455 + $0x8] sm:$0xf]
        %v459 = vld [vmem:[%s455 + $0xc] sm:$0xf]
        %v460 = vld [vmem:[%s455 + $0x10] sm:$0xf]
        %v461 = vld [vmem:[%s455 + $0x14] sm:$0xf]
        %v462 = vld [vmem:[%s455 + $0x18] sm:$0xf]
        %v463 = vld [vmem:[%s455 + $0x1c] sm:$0xf]
        %v472 = vunpack.c.l.b16 %v456
        %v473 = vunpack.c.l.b16 %v457
        %v474 = vunpack.c.l.b16 %v458
        %v475 = vunpack.c.l.b16 %v459
        %v476 = vunpack.c.l.b16 %v460
        %v477 = vunpack.c.l.b16 %v461
        %v478 = vunpack.c.l.b16 %v462
        %v479 = vunpack.c.l.b16 %v463
        %v480 = vpack.c.b16 %v473, %v472
        %v481 = vpack.c.b16 %v475, %v474
        %v482 = vpack.c.b16 %v477, %v476
        %v483 = vpack.c.b16 %v479, %v478
        %488 = vmatpush.bf16.msra.mxu0 %v417
        %489 = vmatpush.bf16.msra.mxu0 %v416
        %490 = vmatpush.bf16.msra.mxu0 %v415
        %491 = vmatpush.bf16.msra.mxu0 %v414
        %492 = vmatpush.bf16.msra.mxu0 %v413
        %493 = vmatpush.bf16.msra.mxu0 %v412
        %494 = vmatpush.bf16.msra.mxu0 %v411
        %495 = vmatpush.bf16.msra.mxu0 %v410
        %496 = vmatmul.bf16.gmra.mxu0 %v480
        %v497 = vpop.f32.mrf.mxu0
        %v498 = vadd.f32 0.0, %v497
        %v499 = vpop.f32.mrf.mxu0
        %v500 = vadd.f32 0.0, %v499
        %501 = vmatmul.bf16.gmra.mxu0 %v481
        %v502 = vpop.f32.mrf.mxu0
        %v503 = vadd.f32 0.0, %v502
        %v504 = vpop.f32.mrf.mxu0
        %v505 = vadd.f32 0.0, %v504
        %506 = vmatmul.bf16.gmra.mxu0 %v482
        %v507 = vpop.f32.mrf.mxu0
        %v508 = vadd.f32 0.0, %v507
        %v509 = vpop.f32.mrf.mxu0
        %v510 = vadd.f32 0.0, %v509
        %511 = vmatmul.bf16.gmra.mxu0 %v483
        %v512 = vpop.f32.mrf.mxu0
        %v513 = vadd.f32 0.0, %v512
        %v514 = vpop.f32.mrf.mxu0
        %v515 = vadd.f32 0.0, %v514
        %516 = vdwg.mxu0
        %v517 = vmax.f32 %v436, %v498
        %v518 = vmax.f32 %v438, %v500
        %v519 = vmax.f32 %v441, %v503
        %v520 = vmax.f32 %v443, %v505
        %v521 = vmax.f32 %v446, %v508
        %v522 = vmax.f32 %v448, %v510
        %v523 = vmax.f32 %v451, %v513
        %v524 = vmax.f32 %v453, %v515
        %s525 = scalar_lea.vmem %s329, 64
        %v526 = vld [vmem:[%s525] sm:$0xf]
        %v527 = vld [vmem:[%s525 + $0x4] sm:$0xf]
        %v528 = vld [vmem:[%s525 + $0x8] sm:$0xf]
        %v529 = vld [vmem:[%s525 + $0xc] sm:$0xf]
        %v530 = vld [vmem:[%s525 + $0x10] sm:$0xf]
        %v531 = vld [vmem:[%s525 + $0x14] sm:$0xf]
        %v532 = vld [vmem:[%s525 + $0x18] sm:$0xf]
        %v533 = vld [vmem:[%s525 + $0x1c] sm:$0xf]
        %v542 = vunpack.c.l.b16 %v526
        %v543 = vunpack.c.l.b16 %v527
        %v544 = vunpack.c.l.b16 %v528
        %v545 = vunpack.c.l.b16 %v529
        %v546 = vunpack.c.l.b16 %v530
        %v547 = vunpack.c.l.b16 %v531
        %v548 = vunpack.c.l.b16 %v532
        %v549 = vunpack.c.l.b16 %v533
        %v550 = vpack.c.b16 %v543, %v542
        %v551 = vpack.c.b16 %v545, %v544
        %v552 = vpack.c.b16 %v547, %v546
        %v553 = vpack.c.b16 %v549, %v548
        %558 = vmatpush.bf16.msra.mxu0 %v417
        %559 = vmatpush.bf16.msra.mxu0 %v416
        %560 = vmatpush.bf16.msra.mxu0 %v415
        %561 = vmatpush.bf16.msra.mxu0 %v414
        %562 = vmatpush.bf16.msra.mxu0 %v413
        %563 = vmatpush.bf16.msra.mxu0 %v412
        %564 = vmatpush.bf16.msra.mxu0 %v411
        %565 = vmatpush.bf16.msra.mxu0 %v410
        %566 = vmatmul.bf16.gmra.mxu0 %v550
        %v567 = vpop.f32.mrf.mxu0
        %v568 = vadd.f32 0.0, %v567
        %v569 = vpop.f32.mrf.mxu0
        %v570 = vadd.f32 0.0, %v569
        %571 = vmatmul.bf16.gmra.mxu0 %v551
        %v572 = vpop.f32.mrf.mxu0
        %v573 = vadd.f32 0.0, %v572
        %v574 = vpop.f32.mrf.mxu0
        %v575 = vadd.f32 0.0, %v574
        %576 = vmatmul.bf16.gmra.mxu0 %v552
        %v577 = vpop.f32.mrf.mxu0
        %v578 = vadd.f32 0.0, %v577
        %v579 = vpop.f32.mrf.mxu0
        %v580 = vadd.f32 0.0, %v579
        %581 = vmatmul.bf16.gmra.mxu0 %v553
        %v582 = vpop.f32.mrf.mxu0
        %v583 = vadd.f32 0.0, %v582
        %v584 = vpop.f32.mrf.mxu0
        %v585 = vadd.f32 0.0, %v584
        %586 = vdwg.mxu0
        %v587 = vmax.f32 %v517, %v568
        %v588 = vmax.f32 %v518, %v570
        %v589 = vmax.f32 %v519, %v573
        %v590 = vmax.f32 %v520, %v575
        %v591 = vmax.f32 %v521, %v578
        %v592 = vmax.f32 %v522, %v580
        %v593 = vmax.f32 %v523, %v583
        %v594 = vmax.f32 %v524, %v585
        %s595 = scalar_lea.vmem %s329, 96
        %v596 = vld [vmem:[%s595] sm:$0xf]
        %v597 = vld [vmem:[%s595 + $0x4] sm:$0xf]
        %v598 = vld [vmem:[%s595 + $0x8] sm:$0xf]
        %v599 = vld [vmem:[%s595 + $0xc] sm:$0xf]
        %v600 = vld [vmem:[%s595 + $0x10] sm:$0xf]
        %v601 = vld [vmem:[%s595 + $0x14] sm:$0xf]
        %v602 = vld [vmem:[%s595 + $0x18] sm:$0xf]
        %v603 = vld [vmem:[%s595 + $0x1c] sm:$0xf]
        %v612 = vunpack.c.l.b16 %v596
        %v613 = vunpack.c.l.b16 %v597
        %v614 = vunpack.c.l.b16 %v598
        %v615 = vunpack.c.l.b16 %v599
        %v616 = vunpack.c.l.b16 %v600
        %v617 = vunpack.c.l.b16 %v601
        %v618 = vunpack.c.l.b16 %v602
        %v619 = vunpack.c.l.b16 %v603
        %v620 = vpack.c.b16 %v613, %v612
        %v621 = vpack.c.b16 %v615, %v614
        %v622 = vpack.c.b16 %v617, %v616
        %v623 = vpack.c.b16 %v619, %v618
        %628 = vmatpush.bf16.msra.mxu0 %v417
        %629 = vmatpush.bf16.msra.mxu0 %v416
        %630 = vmatpush.bf16.msra.mxu0 %v415
        %631 = vmatpush.bf16.msra.mxu0 %v414
        %632 = vmatpush.bf16.msra.mxu0 %v413
        %633 = vmatpush.bf16.msra.mxu0 %v412
        %634 = vmatpush.bf16.msra.mxu0 %v411
        %635 = vmatpush.bf16.msra.mxu0 %v410
        %636 = vmatmul.bf16.gmra.mxu0 %v620
        %v637 = vpop.f32.mrf.mxu0
        %v638 = vadd.f32 0.0, %v637
        %v639 = vpop.f32.mrf.mxu0
        %v640 = vadd.f32 0.0, %v639
        %641 = vmatmul.bf16.gmra.mxu0 %v621
        %v642 = vpop.f32.mrf.mxu0
        %v643 = vadd.f32 0.0, %v642
        %v644 = vpop.f32.mrf.mxu0
        %v645 = vadd.f32 0.0, %v644
        %646 = vmatmul.bf16.gmra.mxu0 %v622
        %v647 = vpop.f32.mrf.mxu0
        %v648 = vadd.f32 0.0, %v647
        %v649 = vpop.f32.mrf.mxu0
        %v650 = vadd.f32 0.0, %v649
        %651 = vmatmul.bf16.gmra.mxu0 %v623
        %v652 = vpop.f32.mrf.mxu0
        %v653 = vadd.f32 0.0, %v652
        %v654 = vpop.f32.mrf.mxu0
        %v655 = vadd.f32 0.0, %v654
        %656 = vdwg.mxu0
        %v657 = vmax.f32 %v587, %v638
        %v658 = vmax.f32 %v588, %v640
        %v659 = vmax.f32 %v589, %v643
        %v660 = vmax.f32 %v590, %v645
        %v661 = vmax.f32 %v591, %v648
        %v662 = vmax.f32 %v592, %v650
        %v663 = vmax.f32 %v593, %v653
        %v664 = vmax.f32 %v594, %v655
        %v665 = vld [vmem:[%s2] sm:$0x1]
        %v667 = vperm.slane %v665, 0
        %v669 = vadd.f32 %v657, %v667
        %v670 = vadd.f32 %v658, %v667
        %v671 = vadd.f32 %v659, %v667
        %v672 = vadd.f32 %v660, %v667
        %v673 = vadd.f32 %v661, %v667
        %v674 = vadd.f32 %v662, %v667
        %v675 = vadd.f32 %v663, %v667
        %v676 = vadd.f32 %v664, %v667
        %v677 = vmax.f32 %v669, 0.0
        %v678 = vmax.f32 %v670, 0.0
        %v679 = vmax.f32 %v671, 0.0
        %v680 = vmax.f32 %v672, 0.0
        %v681 = vmax.f32 %v673, 0.0
        %v682 = vmax.f32 %v674, 0.0
        %v683 = vmax.f32 %v675, 0.0
        %v684 = vmax.f32 %v676, 0.0
        %685 = vst [vmem:[#allocation2] sm:$0xff] 0.0
        %686 = vst [vmem:[#allocation2 + $0x8] sm:$0x3] 0.0
        %687 = vst [vmem:[#allocation2 + $0x10] sm:$0xff] 0.0
        %688 = vst [vmem:[#allocation2 + $0x18] sm:$0x3] 0.0
        %689 = vst [vmem:[#allocation2 + $0x20] sm:$0xff] 0.0
        %690 = vst [vmem:[#allocation2 + $0x28] sm:$0x3] 0.0
        %691 = vst [vmem:[#allocation2 + $0x30] sm:$0xff] 0.0
        %692 = vst [vmem:[#allocation2 + $0x38] sm:$0x3] 0.0
        %693 = vst [vmem:[#allocation2 + $0x40] sm:$0xff] 0.0
        %694 = vst [vmem:[#allocation2 + $0x48] sm:$0x3] 0.0
        %695 = vst [vmem:[#allocation2 + $0x50] sm:$0xff] 0.0
        %696 = vst [vmem:[#allocation2 + $0x58] sm:$0x3] 0.0
        %697 = vst [vmem:[#allocation2 + $0x60] sm:$0xff] 0.0
        %698 = vst [vmem:[#allocation2 + $0x68] sm:$0x3] 0.0
        %699 = vst [vmem:[#allocation2 + $0x70] sm:$0xff] 0.0
        %700 = vst [vmem:[#allocation2 + $0x78] sm:$0x3] 0.0
        %701 = vst [vmem:[#allocation2 + $0x80] sm:$0xff] 0.0
        %702 = vst [vmem:[#allocation2 + $0x88] sm:$0x3] 0.0
        %703 = vst [vmem:[#allocation2 + $0x90] sm:$0xff] 0.0
        %704 = vst [vmem:[#allocation2 + $0x98] sm:$0x3] 0.0
        %s705 = scalar_lea.vmem [#allocation2], 16
        %706 = vst [vmem:[%s705 + $0x1] sm:$0xff] %v677
        %707 = vst [vmem:[%s705 + $0x11] sm:$0xff] %v678
        %708 = vst [vmem:[%s705 + $0x21] sm:$0xff] %v679
        %709 = vst [vmem:[%s705 + $0x31] sm:$0xff] %v680
        %710 = vst [vmem:[%s705 + $0x41] sm:$0xff] %v681
        %711 = vst [vmem:[%s705 + $0x51] sm:$0xff] %v682
        %712 = vst [vmem:[%s705 + $0x61] sm:$0xff] %v683
        %713 = vst [vmem:[%s705 + $0x71] sm:$0xff] %v684
        %v714 = vld [vmem:[#allocation2] sm:$0xff]
        %v715 = vld [vmem:[#allocation2 + $0x10] sm:$0xff]
        %v716 = vld [vmem:[#allocation2 + $0x20] sm:$0xff]
        %v717 = vld [vmem:[#allocation2 + $0x30] sm:$0xff]
        %v718 = vld [vmem:[#allocation2 + $0x40] sm:$0xff]
        %v719 = vld [vmem:[#allocation2 + $0x50] sm:$0xff]
        %v720 = vld [vmem:[#allocation2 + $0x60] sm:$0xff]
        %v721 = vld [vmem:[#allocation2 + $0x70] sm:$0xff]
        %v722 = vpack.c.bf16 %v715, %v714
        %v723 = vpack.c.bf16 %v717, %v716
        %v724 = vpack.c.bf16 %v719, %v718
        %v725 = vpack.c.bf16 %v721, %v720
        %v726 = vld [vmem:[%s3] sm:$0xf]
        %v727 = vld [vmem:[%s3 + $0x4] sm:$0xf]
        %v728 = vld [vmem:[%s3 + $0x8] sm:$0xf]
        %v729 = vld [vmem:[%s3 + $0xc] sm:$0xf]
        %v730 = vld [vmem:[%s3 + $0x10] sm:$0xf]
        %v731 = vld [vmem:[%s3 + $0x14] sm:$0xf]
        %v732 = vld [vmem:[%s3 + $0x18] sm:$0xf]
        %v733 = vld [vmem:[%s3 + $0x1c] sm:$0xf]
        %v734 = vld [vmem:[%s3 + $0x20] sm:$0xf]
        %v735 = vld [vmem:[%s3 + $0x24] sm:$0xf]
        %v736 = vld [vmem:[%s3 + $0x28] sm:$0xf]
        %v737 = vld [vmem:[%s3 + $0x2c] sm:$0xf]
        %v738 = vld [vmem:[%s3 + $0x30] sm:$0xf]
        %v739 = vld [vmem:[%s3 + $0x34] sm:$0xf]
        %v740 = vld [vmem:[%s3 + $0x38] sm:$0xf]
        %v741 = vld [vmem:[%s3 + $0x3c] sm:$0xf]
        %v742 = vld [vmem:[#allocation2 + $0x1] sm:$0xff]
        %v743 = vld [vmem:[#allocation2 + $0x11] sm:$0xff]
        %v744 = vld [vmem:[#allocation2 + $0x21] sm:$0xff]
        %v745 = vld [vmem:[#allocation2 + $0x31] sm:$0xff]
        %v746 = vld [vmem:[#allocation2 + $0x41] sm:$0xff]
        %v747 = vld [vmem:[#allocation2 + $0x51] sm:$0xff]
        %v748 = vld [vmem:[#allocation2 + $0x61] sm:$0xff]
        %v749 = vld [vmem:[#allocation2 + $0x71] sm:$0xff]
        %v750 = vpack.c.bf16 %v743, %v742
        %v751 = vpack.c.bf16 %v745, %v744
        %v752 = vpack.c.bf16 %v747, %v746
        %v753 = vpack.c.bf16 %v749, %v748
        %s754 = scalar_lea.vmem %s3, 64
        %v755 = vld [vmem:[%s754] sm:$0xf]
        %v756 = vld [vmem:[%s754 + $0x4] sm:$0xf]
        %v757 = vld [vmem:[%s754 + $0x8] sm:$0xf]
        %v758 = vld [vmem:[%s754 + $0xc] sm:$0xf]
        %v759 = vld [vmem:[%s754 + $0x10] sm:$0xf]
        %v760 = vld [vmem:[%s754 + $0x14] sm:$0xf]
        %v761 = vld [vmem:[%s754 + $0x18] sm:$0xf]
        %v762 = vld [vmem:[%s754 + $0x1c] sm:$0xf]
        %v763 = vld [vmem:[%s754 + $0x20] sm:$0xf]
        %v764 = vld [vmem:[%s754 + $0x24] sm:$0xf]
        %v765 = vld [vmem:[%s754 + $0x28] sm:$0xf]
        %v766 = vld [vmem:[%s754 + $0x2c] sm:$0xf]
        %v767 = vld [vmem:[%s754 + $0x30] sm:$0xf]
        %v768 = vld [vmem:[%s754 + $0x34] sm:$0xf]
        %v769 = vld [vmem:[%s754 + $0x38] sm:$0xf]
        %v770 = vld [vmem:[%s754 + $0x3c] sm:$0xf]
        %v787 = vunpack.c.l.b16 %v755
        %v788 = vunpack.c.l.b16 %v756
        %v789 = vunpack.c.l.b16 %v757
        %v790 = vunpack.c.l.b16 %v758
        %v791 = vunpack.c.l.b16 %v759
        %v792 = vunpack.c.l.b16 %v760
        %v793 = vunpack.c.l.b16 %v761
        %v794 = vunpack.c.l.b16 %v762
        %v795 = vunpack.c.l.b16 %v763
        %v796 = vunpack.c.l.b16 %v764
        %v797 = vunpack.c.l.b16 %v765
        %v798 = vunpack.c.l.b16 %v766
        %v799 = vunpack.c.l.b16 %v767
        %v800 = vunpack.c.l.b16 %v768
        %v801 = vunpack.c.l.b16 %v769
        %v802 = vunpack.c.l.b16 %v770
        %v803 = vpack.c.b16 %v788, %v787
        %v804 = vpack.c.b16 %v790, %v789
        %v805 = vpack.c.b16 %v792, %v791
        %v806 = vpack.c.b16 %v794, %v793
        %v807 = vpack.c.b16 %v796, %v795
        %v808 = vpack.c.b16 %v798, %v797
        %v809 = vpack.c.b16 %v800, %v799
        %v810 = vpack.c.b16 %v802, %v801
        %819 = vmatpush.bf16.msra.mxu0 %v810
        %820 = vmatpush.bf16.msra.mxu0 %v809
        %821 = vmatpush.bf16.msra.mxu0 %v808
        %822 = vmatpush.bf16.msra.mxu0 %v807
        %823 = vmatpush.bf16.msra.mxu0 %v806
        %824 = vmatpush.bf16.msra.mxu0 %v805
        %825 = vmatpush.bf16.msra.mxu0 %v804
        %826 = vmatpush.bf16.msra.mxu0 %v803
        %827 = vmatmul.bf16.gmra.mxu0 %v750
        %v828 = vpop.f32.mrf.mxu0
        %v829 = vadd.f32 0.0, %v828
        %v830 = vpop.f32.mrf.mxu0
        %v831 = vadd.f32 0.0, %v830
        %832 = vmatmul.bf16.gmra.mxu0 %v751
        %v833 = vpop.f32.mrf.mxu0
        %v834 = vadd.f32 0.0, %v833
        %v835 = vpop.f32.mrf.mxu0
        %v836 = vadd.f32 0.0, %v835
        %837 = vmatmul.bf16.gmra.mxu0 %v752
        %v838 = vpop.f32.mrf.mxu0
        %v839 = vadd.f32 0.0, %v838
        %v840 = vpop.f32.mrf.mxu0
        %v841 = vadd.f32 0.0, %v840
        %842 = vmatmul.bf16.gmra.mxu0 %v753
        %v843 = vpop.f32.mrf.mxu0
        %v844 = vadd.f32 0.0, %v843
        %v845 = vpop.f32.mrf.mxu0
        %v846 = vadd.f32 0.0, %v845
        %847 = vdwg.mxu0
        %v864 = vunpack.c.l.b16 %v726
        %v865 = vunpack.c.l.b16 %v727
        %v866 = vunpack.c.l.b16 %v728
        %v867 = vunpack.c.l.b16 %v729
        %v868 = vunpack.c.l.b16 %v730
        %v869 = vunpack.c.l.b16 %v731
        %v870 = vunpack.c.l.b16 %v732
        %v871 = vunpack.c.l.b16 %v733
        %v872 = vunpack.c.l.b16 %v734
        %v873 = vunpack.c.l.b16 %v735
        %v874 = vunpack.c.l.b16 %v736
        %v875 = vunpack.c.l.b16 %v737
        %v876 = vunpack.c.l.b16 %v738
        %v877 = vunpack.c.l.b16 %v739
        %v878 = vunpack.c.l.b16 %v740
        %v879 = vunpack.c.l.b16 %v741
        %v880 = vpack.c.b16 %v865, %v864
        %v881 = vpack.c.b16 %v867, %v866
        %v882 = vpack.c.b16 %v869, %v868
        %v883 = vpack.c.b16 %v871, %v870
        %v884 = vpack.c.b16 %v873, %v872
        %v885 = vpack.c.b16 %v875, %v874
        %v886 = vpack.c.b16 %v877, %v876
        %v887 = vpack.c.b16 %v879, %v878
        %896 = vmatpush.bf16.msra.mxu0 %v887
        %897 = vmatpush.bf16.msra.mxu0 %v886
        %898 = vmatpush.bf16.msra.mxu0 %v885
        %899 = vmatpush.bf16.msra.mxu0 %v884
        %900 = vmatpush.bf16.msra.mxu0 %v883
        %901 = vmatpush.bf16.msra.mxu0 %v882
        %902 = vmatpush.bf16.msra.mxu0 %v881
        %903 = vmatpush.bf16.msra.mxu0 %v880
        %904 = vmatmul.bf16.gmra.mxu0 %v722
        %v905 = vpop.f32.mrf.mxu0
        %v906 = vadd.f32 %v829, %v905
        %v907 = vpop.f32.mrf.mxu0
        %v908 = vadd.f32 %v831, %v907
        %909 = vmatmul.bf16.gmra.mxu0 %v723
        %v910 = vpop.f32.mrf.mxu0
        %v911 = vadd.f32 %v834, %v910
        %v912 = vpop.f32.mrf.mxu0
        %v913 = vadd.f32 %v836, %v912
        %914 = vmatmul.bf16.gmra.mxu0 %v724
        %v915 = vpop.f32.mrf.mxu0
        %v916 = vadd.f32 %v839, %v915
        %v917 = vpop.f32.mrf.mxu0
        %v918 = vadd.f32 %v841, %v917
        %919 = vmatmul.bf16.gmra.mxu0 %v725
        %v920 = vpop.f32.mrf.mxu0
        %v921 = vadd.f32 %v844, %v920
        %v922 = vpop.f32.mrf.mxu0
        %v923 = vadd.f32 %v846, %v922
        %924 = vdwg.mxu0
        %v925 = vld [vmem:[#allocation2 + $0x2] sm:$0xff]
        %v926 = vld [vmem:[#allocation2 + $0x12] sm:$0xff]
        %v927 = vld [vmem:[#allocation2 + $0x22] sm:$0xff]
        %v928 = vld [vmem:[#allocation2 + $0x32] sm:$0xff]
        %v929 = vld [vmem:[#allocation2 + $0x42] sm:$0xff]
        %v930 = vld [vmem:[#allocation2 + $0x52] sm:$0xff]
        %v931 = vld [vmem:[#allocation2 + $0x62] sm:$0xff]
        %v932 = vld [vmem:[#allocation2 + $0x72] sm:$0xff]
        %v933 = vpack.c.bf16 %v926, %v925
        %v934 = vpack.c.bf16 %v928, %v927
        %v935 = vpack.c.bf16 %v930, %v929
        %v936 = vpack.c.bf16 %v932, %v931
        %s937 = scalar_lea.vmem %s3, 128
        %v938 = vld [vmem:[%s937] sm:$0xf]
        %v939 = vld [vmem:[%s937 + $0x4] sm:$0xf]
        %v940 = vld [vmem:[%s937 + $0x8] sm:$0xf]
        %v941 = vld [vmem:[%s937 + $0xc] sm:$0xf]
        %v942 = vld [vmem:[%s937 + $0x10] sm:$0xf]
        %v943 = vld [vmem:[%s937 + $0x14] sm:$0xf]
        %v944 = vld [vmem:[%s937 + $0x18] sm:$0xf]
        %v945 = vld [vmem:[%s937 + $0x1c] sm:$0xf]
        %v946 = vld [vmem:[%s937 + $0x20] sm:$0xf]
        %v947 = vld [vmem:[%s937 + $0x24] sm:$0xf]
        %v948 = vld [vmem:[%s937 + $0x28] sm:$0xf]
        %v949 = vld [vmem:[%s937 + $0x2c] sm:$0xf]
        %v950 = vld [vmem:[%s937 + $0x30] sm:$0xf]
        %v951 = vld [vmem:[%s937 + $0x34] sm:$0xf]
        %v952 = vld [vmem:[%s937 + $0x38] sm:$0xf]
        %v953 = vld [vmem:[%s937 + $0x3c] sm:$0xf]
        %v970 = vunpack.c.l.b16 %v938
        %v971 = vunpack.c.l.b16 %v939
        %v972 = vunpack.c.l.b16 %v940
        %v973 = vunpack.c.l.b16 %v941
        %v974 = vunpack.c.l.b16 %v942
        %v975 = vunpack.c.l.b16 %v943
        %v976 = vunpack.c.l.b16 %v944
        %v977 = vunpack.c.l.b16 %v945
        %v978 = vunpack.c.l.b16 %v946
        %v979 = vunpack.c.l.b16 %v947
        %v980 = vunpack.c.l.b16 %v948
        %v981 = vunpack.c.l.b16 %v949
        %v982 = vunpack.c.l.b16 %v950
        %v983 = vunpack.c.l.b16 %v951
        %v984 = vunpack.c.l.b16 %v952
        %v985 = vunpack.c.l.b16 %v953
        %v986 = vpack.c.b16 %v971, %v970
        %v987 = vpack.c.b16 %v973, %v972
        %v988 = vpack.c.b16 %v975, %v974
        %v989 = vpack.c.b16 %v977, %v976
        %v990 = vpack.c.b16 %v979, %v978
        %v991 = vpack.c.b16 %v981, %v980
        %v992 = vpack.c.b16 %v983, %v982
        %v993 = vpack.c.b16 %v985, %v984
        %1002 = vmatpush.bf16.msra.mxu0 %v993
        %1003 = vmatpush.bf16.msra.mxu0 %v992
        %1004 = vmatpush.bf16.msra.mxu0 %v991
        %1005 = vmatpush.bf16.msra.mxu0 %v990
        %1006 = vmatpush.bf16.msra.mxu0 %v989
        %1007 = vmatpush.bf16.msra.mxu0 %v988
        %1008 = vmatpush.bf16.msra.mxu0 %v987
        %1009 = vmatpush.bf16.msra.mxu0 %v986
        %1010 = vmatmul.bf16.gmra.mxu0 %v933
        %v1011 = vpop.f32.mrf.mxu0
        %v1012 = vadd.f32 0.0, %v1011
        %v1013 = vpop.f32.mrf.mxu0
        %v1014 = vadd.f32 0.0, %v1013
        %1015 = vmatmul.bf16.gmra.mxu0 %v934
        %v1016 = vpop.f32.mrf.mxu0
        %v1017 = vadd.f32 0.0, %v1016
        %v1018 = vpop.f32.mrf.mxu0
        %v1019 = vadd.f32 0.0, %v1018
        %1020 = vmatmul.bf16.gmra.mxu0 %v935
        %v1021 = vpop.f32.mrf.mxu0
        %v1022 = vadd.f32 0.0, %v1021
        %v1023 = vpop.f32.mrf.mxu0
        %v1024 = vadd.f32 0.0, %v1023
        %1025 = vmatmul.bf16.gmra.mxu0 %v936
        %v1026 = vpop.f32.mrf.mxu0
        %v1027 = vadd.f32 0.0, %v1026
        %v1028 = vpop.f32.mrf.mxu0
        %v1029 = vadd.f32 0.0, %v1028
        %1030 = vdwg.mxu0
        %v1031 = vadd.f32 %v906, %v1012
        %v1032 = vadd.f32 %v908, %v1014
        %v1033 = vadd.f32 %v911, %v1017
        %v1034 = vadd.f32 %v913, %v1019
        %v1035 = vadd.f32 %v916, %v1022
        %v1036 = vadd.f32 %v918, %v1024
        %v1037 = vadd.f32 %v921, %v1027
        %v1038 = vadd.f32 %v923, %v1029
        %v1039 = vld [vmem:[%s705] sm:$0xff]
        %v1040 = vld [vmem:[%s705 + $0x10] sm:$0xff]
        %v1041 = vld [vmem:[%s705 + $0x20] sm:$0xff]
        %v1042 = vld [vmem:[%s705 + $0x30] sm:$0xff]
        %v1043 = vld [vmem:[%s705 + $0x40] sm:$0xff]
        %v1044 = vld [vmem:[%s705 + $0x50] sm:$0xff]
        %v1045 = vld [vmem:[%s705 + $0x60] sm:$0xff]
        %v1046 = vld [vmem:[%s705 + $0x70] sm:$0xff]
        %v1047 = vpack.c.bf16 %v1040, %v1039
        %v1048 = vpack.c.bf16 %v1042, %v1041
        %v1049 = vpack.c.bf16 %v1044, %v1043
        %v1050 = vpack.c.bf16 %v1046, %v1045
        %s1051 = scalar_lea.vmem %s3, 192
        %v1052 = vld [vmem:[%s1051] sm:$0xf]
        %v1053 = vld [vmem:[%s1051 + $0x4] sm:$0xf]
        %v1054 = vld [vmem:[%s1051 + $0x8] sm:$0xf]
        %v1055 = vld [vmem:[%s1051 + $0xc] sm:$0xf]
        %v1056 = vld [vmem:[%s1051 + $0x10] sm:$0xf]
        %v1057 = vld [vmem:[%s1051 + $0x14] sm:$0xf]
        %v1058 = vld [vmem:[%s1051 + $0x18] sm:$0xf]
        %v1059 = vld [vmem:[%s1051 + $0x1c] sm:$0xf]
        %v1060 = vld [vmem:[%s1051 + $0x20] sm:$0xf]
        %v1061 = vld [vmem:[%s1051 + $0x24] sm:$0xf]
        %v1062 = vld [vmem:[%s1051 + $0x28] sm:$0xf]
        %v1063 = vld [vmem:[%s1051 + $0x2c] sm:$0xf]
        %v1064 = vld [vmem:[%s1051 + $0x30] sm:$0xf]
        %v1065 = vld [vmem:[%s1051 + $0x34] sm:$0xf]
        %v1066 = vld [vmem:[%s1051 + $0x38] sm:$0xf]
        %v1067 = vld [vmem:[%s1051 + $0x3c] sm:$0xf]
        %v1084 = vunpack.c.l.b16 %v1052
        %v1085 = vunpack.c.l.b16 %v1053
        %v1086 = vunpack.c.l.b16 %v1054
        %v1087 = vunpack.c.l.b16 %v1055
        %v1088 = vunpack.c.l.b16 %v1056
        %v1089 = vunpack.c.l.b16 %v1057
        %v1090 = vunpack.c.l.b16 %v1058
        %v1091 = vunpack.c.l.b16 %v1059
        %v1092 = vunpack.c.l.b16 %v1060
        %v1093 = vunpack.c.l.b16 %v1061
        %v1094 = vunpack.c.l.b16 %v1062
        %v1095 = vunpack.c.l.b16 %v1063
        %v1096 = vunpack.c.l.b16 %v1064
        %v1097 = vunpack.c.l.b16 %v1065
        %v1098 = vunpack.c.l.b16 %v1066
        %v1099 = vunpack.c.l.b16 %v1067
        %v1100 = vpack.c.b16 %v1085, %v1084
        %v1101 = vpack.c.b16 %v1087, %v1086
        %v1102 = vpack.c.b16 %v1089, %v1088
        %v1103 = vpack.c.b16 %v1091, %v1090
        %v1104 = vpack.c.b16 %v1093, %v1092
        %v1105 = vpack.c.b16 %v1095, %v1094
        %v1106 = vpack.c.b16 %v1097, %v1096
        %v1107 = vpack.c.b16 %v1099, %v1098
        %1116 = vmatpush.bf16.msra.mxu0 %v1107
        %1117 = vmatpush.bf16.msra.mxu0 %v1106
        %1118 = vmatpush.bf16.msra.mxu0 %v1105
        %1119 = vmatpush.bf16.msra.mxu0 %v1104
        %1120 = vmatpush.bf16.msra.mxu0 %v1103
        %1121 = vmatpush.bf16.msra.mxu0 %v1102
        %1122 = vmatpush.bf16.msra.mxu0 %v1101
        %1123 = vmatpush.bf16.msra.mxu0 %v1100
        %1124 = vmatmul.bf16.gmra.mxu0 %v1047
        %v1125 = vpop.f32.mrf.mxu0
        %v1126 = vadd.f32 0.0, %v1125
        %v1127 = vpop.f32.mrf.mxu0
        %v1128 = vadd.f32 0.0, %v1127
        %1129 = vmatmul.bf16.gmra.mxu0 %v1048
        %v1130 = vpop.f32.mrf.mxu0
        %v1131 = vadd.f32 0.0, %v1130
        %v1132 = vpop.f32.mrf.mxu0
        %v1133 = vadd.f32 0.0, %v1132
        %1134 = vmatmul.bf16.gmra.mxu0 %v1049
        %v1135 = vpop.f32.mrf.mxu0
        %v1136 = vadd.f32 0.0, %v1135
        %v1137 = vpop.f32.mrf.mxu0
        %v1138 = vadd.f32 0.0, %v1137
        %1139 = vmatmul.bf16.gmra.mxu0 %v1050
        %v1140 = vpop.f32.mrf.mxu0
        %v1141 = vadd.f32 0.0, %v1140
        %v1142 = vpop.f32.mrf.mxu0
        %v1143 = vadd.f32 0.0, %v1142
        %1144 = vdwg.mxu0
        %v1145 = vadd.f32 %v1031, %v1126
        %v1146 = vadd.f32 %v1032, %v1128
        %v1147 = vadd.f32 %v1033, %v1131
        %v1148 = vadd.f32 %v1034, %v1133
        %v1149 = vadd.f32 %v1035, %v1136
        %v1150 = vadd.f32 %v1036, %v1138
        %v1151 = vadd.f32 %v1037, %v1141
        %v1152 = vadd.f32 %v1038, %v1143
        %v1153 = vld [vmem:[%s705 + $0x1] sm:$0xff]
        %v1154 = vld [vmem:[%s705 + $0x11] sm:$0xff]
        %v1155 = vld [vmem:[%s705 + $0x21] sm:$0xff]
        %v1156 = vld [vmem:[%s705 + $0x31] sm:$0xff]
        %v1157 = vld [vmem:[%s705 + $0x41] sm:$0xff]
        %v1158 = vld [vmem:[%s705 + $0x51] sm:$0xff]
        %v1159 = vld [vmem:[%s705 + $0x61] sm:$0xff]
        %v1160 = vld [vmem:[%s705 + $0x71] sm:$0xff]
        %v1161 = vpack.c.bf16 %v1154, %v1153
        %v1162 = vpack.c.bf16 %v1156, %v1155
        %v1163 = vpack.c.bf16 %v1158, %v1157
        %v1164 = vpack.c.bf16 %v1160, %v1159
        %s1165 = scalar_lea.vmem %s3, 256
        %v1166 = vld [vmem:[%s1165] sm:$0xf]
        %v1167 = vld [vmem:[%s1165 + $0x4] sm:$0xf]
        %v1168 = vld [vmem:[%s1165 + $0x8] sm:$0xf]
        %v1169 = vld [vmem:[%s1165 + $0xc] sm:$0xf]
        %v1170 = vld [vmem:[%s1165 + $0x10] sm:$0xf]
        %v1171 = vld [vmem:[%s1165 + $0x14] sm:$0xf]
        %v1172 = vld [vmem:[%s1165 + $0x18] sm:$0xf]
        %v1173 = vld [vmem:[%s1165 + $0x1c] sm:$0xf]
        %v1174 = vld [vmem:[%s1165 + $0x20] sm:$0xf]
        %v1175 = vld [vmem:[%s1165 + $0x24] sm:$0xf]
        %v1176 = vld [vmem:[%s1165 + $0x28] sm:$0xf]
        %v1177 = vld [vmem:[%s1165 + $0x2c] sm:$0xf]
        %v1178 = vld [vmem:[%s1165 + $0x30] sm:$0xf]
        %v1179 = vld [vmem:[%s1165 + $0x34] sm:$0xf]
        %v1180 = vld [vmem:[%s1165 + $0x38] sm:$0xf]
        %v1181 = vld [vmem:[%s1165 + $0x3c] sm:$0xf]
        %v1198 = vunpack.c.l.b16 %v1166
        %v1199 = vunpack.c.l.b16 %v1167
        %v1200 = vunpack.c.l.b16 %v1168
        %v1201 = vunpack.c.l.b16 %v1169
        %v1202 = vunpack.c.l.b16 %v1170
        %v1203 = vunpack.c.l.b16 %v1171
        %v1204 = vunpack.c.l.b16 %v1172
        %v1205 = vunpack.c.l.b16 %v1173
        %v1206 = vunpack.c.l.b16 %v1174
        %v1207 = vunpack.c.l.b16 %v1175
        %v1208 = vunpack.c.l.b16 %v1176
        %v1209 = vunpack.c.l.b16 %v1177
        %v1210 = vunpack.c.l.b16 %v1178
        %v1211 = vunpack.c.l.b16 %v1179
        %v1212 = vunpack.c.l.b16 %v1180
        %v1213 = vunpack.c.l.b16 %v1181
        %v1214 = vpack.c.b16 %v1199, %v1198
        %v1215 = vpack.c.b16 %v1201, %v1200
        %v1216 = vpack.c.b16 %v1203, %v1202
        %v1217 = vpack.c.b16 %v1205, %v1204
        %v1218 = vpack.c.b16 %v1207, %v1206
        %v1219 = vpack.c.b16 %v1209, %v1208
        %v1220 = vpack.c.b16 %v1211, %v1210
        %v1221 = vpack.c.b16 %v1213, %v1212
        %1230 = vmatpush.bf16.msra.mxu0 %v1221
        %1231 = vmatpush.bf16.msra.mxu0 %v1220
        %1232 = vmatpush.bf16.msra.mxu0 %v1219
        %1233 = vmatpush.bf16.msra.mxu0 %v1218
        %1234 = vmatpush.bf16.msra.mxu0 %v1217
        %1235 = vmatpush.bf16.msra.mxu0 %v1216
        %1236 = vmatpush.bf16.msra.mxu0 %v1215
        %1237 = vmatpush.bf16.msra.mxu0 %v1214
        %1238 = vmatmul.bf16.gmra.mxu0 %v1161
        %v1239 = vpop.f32.mrf.mxu0
        %v1240 = vadd.f32 0.0, %v1239
        %v1241 = vpop.f32.mrf.mxu0
        %v1242 = vadd.f32 0.0, %v1241
        %1243 = vmatmul.bf16.gmra.mxu0 %v1162
        %v1244 = vpop.f32.mrf.mxu0
        %v1245 = vadd.f32 0.0, %v1244
        %v1246 = vpop.f32.mrf.mxu0
        %v1247 = vadd.f32 0.0, %v1246
        %1248 = vmatmul.bf16.gmra.mxu0 %v1163
        %v1249 = vpop.f32.mrf.mxu0
        %v1250 = vadd.f32 0.0, %v1249
        %v1251 = vpop.f32.mrf.mxu0
        %v1252 = vadd.f32 0.0, %v1251
        %1253 = vmatmul.bf16.gmra.mxu0 %v1164
        %v1254 = vpop.f32.mrf.mxu0
        %v1255 = vadd.f32 0.0, %v1254
        %v1256 = vpop.f32.mrf.mxu0
        %v1257 = vadd.f32 0.0, %v1256
        %1258 = vdwg.mxu0
        %v1259 = vadd.f32 %v1145, %v1240
        %v1260 = vadd.f32 %v1146, %v1242
        %v1261 = vadd.f32 %v1147, %v1245
        %v1262 = vadd.f32 %v1148, %v1247
        %v1263 = vadd.f32 %v1149, %v1250
        %v1264 = vadd.f32 %v1150, %v1252
        %v1265 = vadd.f32 %v1151, %v1255
        %v1266 = vadd.f32 %v1152, %v1257
        %v1267 = vld [vmem:[%s705 + $0x2] sm:$0xff]
        %v1268 = vld [vmem:[%s705 + $0x12] sm:$0xff]
        %v1269 = vld [vmem:[%s705 + $0x22] sm:$0xff]
        %v1270 = vld [vmem:[%s705 + $0x32] sm:$0xff]
        %v1271 = vld [vmem:[%s705 + $0x42] sm:$0xff]
        %v1272 = vld [vmem:[%s705 + $0x52] sm:$0xff]
        %v1273 = vld [vmem:[%s705 + $0x62] sm:$0xff]
        %v1274 = vld [vmem:[%s705 + $0x72] sm:$0xff]
        %v1275 = vpack.c.bf16 %v1268, %v1267
        %v1276 = vpack.c.bf16 %v1270, %v1269
        %v1277 = vpack.c.bf16 %v1272, %v1271
        %v1278 = vpack.c.bf16 %v1274, %v1273
        %s1279 = scalar_lea.vmem %s3, 320
        %v1280 = vld [vmem:[%s1279] sm:$0xf]
        %v1281 = vld [vmem:[%s1279 + $0x4] sm:$0xf]
        %v1282 = vld [vmem:[%s1279 + $0x8] sm:$0xf]
        %v1283 = vld [vmem:[%s1279 + $0xc] sm:$0xf]
        %v1284 = vld [vmem:[%s1279 + $0x10] sm:$0xf]
        %v1285 = vld [vmem:[%s1279 + $0x14] sm:$0xf]
        %v1286 = vld [vmem:[%s1279 + $0x18] sm:$0xf]
        %v1287 = vld [vmem:[%s1279 + $0x1c] sm:$0xf]
        %v1288 = vld [vmem:[%s1279 + $0x20] sm:$0xf]
        %v1289 = vld [vmem:[%s1279 + $0x24] sm:$0xf]
        %v1290 = vld [vmem:[%s1279 + $0x28] sm:$0xf]
        %v1291 = vld [vmem:[%s1279 + $0x2c] sm:$0xf]
        %v1292 = vld [vmem:[%s1279 + $0x30] sm:$0xf]
        %v1293 = vld [vmem:[%s1279 + $0x34] sm:$0xf]
        %v1294 = vld [vmem:[%s1279 + $0x38] sm:$0xf]
        %v1295 = vld [vmem:[%s1279 + $0x3c] sm:$0xf]
        %v1312 = vunpack.c.l.b16 %v1280
        %v1313 = vunpack.c.l.b16 %v1281
        %v1314 = vunpack.c.l.b16 %v1282
        %v1315 = vunpack.c.l.b16 %v1283
        %v1316 = vunpack.c.l.b16 %v1284
        %v1317 = vunpack.c.l.b16 %v1285
        %v1318 = vunpack.c.l.b16 %v1286
        %v1319 = vunpack.c.l.b16 %v1287
        %v1320 = vunpack.c.l.b16 %v1288
        %v1321 = vunpack.c.l.b16 %v1289
        %v1322 = vunpack.c.l.b16 %v1290
        %v1323 = vunpack.c.l.b16 %v1291
        %v1324 = vunpack.c.l.b16 %v1292
        %v1325 = vunpack.c.l.b16 %v1293
        %v1326 = vunpack.c.l.b16 %v1294
        %v1327 = vunpack.c.l.b16 %v1295
        %v1328 = vpack.c.b16 %v1313, %v1312
        %v1329 = vpack.c.b16 %v1315, %v1314
        %v1330 = vpack.c.b16 %v1317, %v1316
        %v1331 = vpack.c.b16 %v1319, %v1318
        %v1332 = vpack.c.b16 %v1321, %v1320
        %v1333 = vpack.c.b16 %v1323, %v1322
        %v1334 = vpack.c.b16 %v1325, %v1324
        %v1335 = vpack.c.b16 %v1327, %v1326
        %1344 = vmatpush.bf16.msra.mxu0 %v1335
        %1345 = vmatpush.bf16.msra.mxu0 %v1334
        %1346 = vmatpush.bf16.msra.mxu0 %v1333
        %1347 = vmatpush.bf16.msra.mxu0 %v1332
        %1348 = vmatpush.bf16.msra.mxu0 %v1331
        %1349 = vmatpush.bf16.msra.mxu0 %v1330
        %1350 = vmatpush.bf16.msra.mxu0 %v1329
        %1351 = vmatpush.bf16.msra.mxu0 %v1328
        %1352 = vmatmul.bf16.gmra.mxu0 %v1275
        %v1353 = vpop.f32.mrf.mxu0
        %v1354 = vadd.f32 0.0, %v1353
        %v1355 = vpop.f32.mrf.mxu0
        %v1356 = vadd.f32 0.0, %v1355
        %1357 = vmatmul.bf16.gmra.mxu0 %v1276
        %v1358 = vpop.f32.mrf.mxu0
        %v1359 = vadd.f32 0.0, %v1358
        %v1360 = vpop.f32.mrf.mxu0
        %v1361 = vadd.f32 0.0, %v1360
        %1362 = vmatmul.bf16.gmra.mxu0 %v1277
        %v1363 = vpop.f32.mrf.mxu0
        %v1364 = vadd.f32 0.0, %v1363
        %v1365 = vpop.f32.mrf.mxu0
        %v1366 = vadd.f32 0.0, %v1365
        %1367 = vmatmul.bf16.gmra.mxu0 %v1278
        %v1368 = vpop.f32.mrf.mxu0
        %v1369 = vadd.f32 0.0, %v1368
        %v1370 = vpop.f32.mrf.mxu0
        %v1371 = vadd.f32 0.0, %v1370
        %1372 = vdwg.mxu0
        %v1373 = vadd.f32 %v1259, %v1354
        %v1374 = vadd.f32 %v1260, %v1356
        %v1375 = vadd.f32 %v1261, %v1359
        %v1376 = vadd.f32 %v1262, %v1361
        %v1377 = vadd.f32 %v1263, %v1364
        %v1378 = vadd.f32 %v1264, %v1366
        %v1379 = vadd.f32 %v1265, %v1369
        %v1380 = vadd.f32 %v1266, %v1371
        %s1381 = scalar_lea.vmem [#allocation2], 32
        %v1382 = vld [vmem:[%s1381] sm:$0xff]
        %v1383 = vld [vmem:[%s1381 + $0x10] sm:$0xff]
        %v1384 = vld [vmem:[%s1381 + $0x20] sm:$0xff]
        %v1385 = vld [vmem:[%s1381 + $0x30] sm:$0xff]
        %v1386 = vld [vmem:[%s1381 + $0x40] sm:$0xff]
        %v1387 = vld [vmem:[%s1381 + $0x50] sm:$0xff]
        %v1388 = vld [vmem:[%s1381 + $0x60] sm:$0xff]
        %v1389 = vld [vmem:[%s1381 + $0x70] sm:$0xff]
        %v1390 = vpack.c.bf16 %v1383, %v1382
        %v1391 = vpack.c.bf16 %v1385, %v1384
        %v1392 = vpack.c.bf16 %v1387, %v1386
        %v1393 = vpack.c.bf16 %v1389, %v1388
        %s1394 = scalar_lea.vmem %s3, 384
        %v1395 = vld [vmem:[%s1394] sm:$0xf]
        %v1396 = vld [vmem:[%s1394 + $0x4] sm:$0xf]
        %v1397 = vld [vmem:[%s1394 + $0x8] sm:$0xf]
        %v1398 = vld [vmem:[%s1394 + $0xc] sm:$0xf]
        %v1399 = vld [vmem:[%s1394 + $0x10] sm:$0xf]
        %v1400 = vld [vmem:[%s1394 + $0x14] sm:$0xf]
        %v1401 = vld [vmem:[%s1394 + $0x18] sm:$0xf]
        %v1402 = vld [vmem:[%s1394 + $0x1c] sm:$0xf]
        %v1403 = vld [vmem:[%s1394 + $0x20] sm:$0xf]
        %v1404 = vld [vmem:[%s1394 + $0x24] sm:$0xf]
        %v1405 = vld [vmem:[%s1394 + $0x28] sm:$0xf]
        %v1406 = vld [vmem:[%s1394 + $0x2c] sm:$0xf]
        %v1407 = vld [vmem:[%s1394 + $0x30] sm:$0xf]
        %v1408 = vld [vmem:[%s1394 + $0x34] sm:$0xf]
        %v1409 = vld [vmem:[%s1394 + $0x38] sm:$0xf]
        %v1410 = vld [vmem:[%s1394 + $0x3c] sm:$0xf]
        %v1427 = vunpack.c.l.b16 %v1395
        %v1428 = vunpack.c.l.b16 %v1396
        %v1429 = vunpack.c.l.b16 %v1397
        %v1430 = vunpack.c.l.b16 %v1398
        %v1431 = vunpack.c.l.b16 %v1399
        %v1432 = vunpack.c.l.b16 %v1400
        %v1433 = vunpack.c.l.b16 %v1401
        %v1434 = vunpack.c.l.b16 %v1402
        %v1435 = vunpack.c.l.b16 %v1403
        %v1436 = vunpack.c.l.b16 %v1404
        %v1437 = vunpack.c.l.b16 %v1405
        %v1438 = vunpack.c.l.b16 %v1406
        %v1439 = vunpack.c.l.b16 %v1407
        %v1440 = vunpack.c.l.b16 %v1408
        %v1441 = vunpack.c.l.b16 %v1409
        %v1442 = vunpack.c.l.b16 %v1410
        %v1443 = vpack.c.b16 %v1428, %v1427
        %v1444 = vpack.c.b16 %v1430, %v1429
        %v1445 = vpack.c.b16 %v1432, %v1431
        %v1446 = vpack.c.b16 %v1434, %v1433
        %v1447 = vpack.c.b16 %v1436, %v1435
        %v1448 = vpack.c.b16 %v1438, %v1437
        %v1449 = vpack.c.b16 %v1440, %v1439
        %v1450 = vpack.c.b16 %v1442, %v1441
        %1459 = vmatpush.bf16.msra.mxu0 %v1450
        %1460 = vmatpush.bf16.msra.mxu0 %v1449
        %1461 = vmatpush.bf16.msra.mxu0 %v1448
        %1462 = vmatpush.bf16.msra.mxu0 %v1447
        %1463 = vmatpush.bf16.msra.mxu0 %v1446
        %1464 = vmatpush.bf16.msra.mxu0 %v1445
        %1465 = vmatpush.bf16.msra.mxu0 %v1444
        %1466 = vmatpush.bf16.msra.mxu0 %v1443
        %1467 = vmatmul.bf16.gmra.mxu0 %v1390
        %v1468 = vpop.f32.mrf.mxu0
        %v1469 = vadd.f32 0.0, %v1468
        %v1470 = vpop.f32.mrf.mxu0
        %v1471 = vadd.f32 0.0, %v1470
        %1472 = vmatmul.bf16.gmra.mxu0 %v1391
        %v1473 = vpop.f32.mrf.mxu0
        %v1474 = vadd.f32 0.0, %v1473
        %v1475 = vpop.f32.mrf.mxu0
        %v1476 = vadd.f32 0.0, %v1475
        %1477 = vmatmul.bf16.gmra.mxu0 %v1392
        %v1478 = vpop.f32.mrf.mxu0
        %v1479 = vadd.f32 0.0, %v1478
        %v1480 = vpop.f32.mrf.mxu0
        %v1481 = vadd.f32 0.0, %v1480
        %1482 = vmatmul.bf16.gmra.mxu0 %v1393
        %v1483 = vpop.f32.mrf.mxu0
        %v1484 = vadd.f32 0.0, %v1483
        %v1485 = vpop.f32.mrf.mxu0
        %v1486 = vadd.f32 0.0, %v1485
        %1487 = vdwg.mxu0
        %v1488 = vadd.f32 %v1373, %v1469
        %v1489 = vadd.f32 %v1374, %v1471
        %v1490 = vadd.f32 %v1375, %v1474
        %v1491 = vadd.f32 %v1376, %v1476
        %v1492 = vadd.f32 %v1377, %v1479
        %v1493 = vadd.f32 %v1378, %v1481
        %v1494 = vadd.f32 %v1379, %v1484
        %v1495 = vadd.f32 %v1380, %v1486
        %v1496 = vld [vmem:[%s1381 + $0x1] sm:$0xff]
        %v1497 = vld [vmem:[%s1381 + $0x11] sm:$0xff]
        %v1498 = vld [vmem:[%s1381 + $0x21] sm:$0xff]
        %v1499 = vld [vmem:[%s1381 + $0x31] sm:$0xff]
        %v1500 = vld [vmem:[%s1381 + $0x41] sm:$0xff]
        %v1501 = vld [vmem:[%s1381 + $0x51] sm:$0xff]
        %v1502 = vld [vmem:[%s1381 + $0x61] sm:$0xff]
        %v1503 = vld [vmem:[%s1381 + $0x71] sm:$0xff]
        %v1504 = vpack.c.bf16 %v1497, %v1496
        %v1505 = vpack.c.bf16 %v1499, %v1498
        %v1506 = vpack.c.bf16 %v1501, %v1500
        %v1507 = vpack.c.bf16 %v1503, %v1502
        %s1508 = scalar_lea.vmem %s3, 448
        %v1509 = vld [vmem:[%s1508] sm:$0xf]
        %v1510 = vld [vmem:[%s1508 + $0x4] sm:$0xf]
        %v1511 = vld [vmem:[%s1508 + $0x8] sm:$0xf]
        %v1512 = vld [vmem:[%s1508 + $0xc] sm:$0xf]
        %v1513 = vld [vmem:[%s1508 + $0x10] sm:$0xf]
        %v1514 = vld [vmem:[%s1508 + $0x14] sm:$0xf]
        %v1515 = vld [vmem:[%s1508 + $0x18] sm:$0xf]
        %v1516 = vld [vmem:[%s1508 + $0x1c] sm:$0xf]
        %v1517 = vld [vmem:[%s1508 + $0x20] sm:$0xf]
        %v1518 = vld [vmem:[%s1508 + $0x24] sm:$0xf]
        %v1519 = vld [vmem:[%s1508 + $0x28] sm:$0xf]
        %v1520 = vld [vmem:[%s1508 + $0x2c] sm:$0xf]
        %v1521 = vld [vmem:[%s1508 + $0x30] sm:$0xf]
        %v1522 = vld [vmem:[%s1508 + $0x34] sm:$0xf]
        %v1523 = vld [vmem:[%s1508 + $0x38] sm:$0xf]
        %v1524 = vld [vmem:[%s1508 + $0x3c] sm:$0xf]
        %v1541 = vunpack.c.l.b16 %v1509
        %v1542 = vunpack.c.l.b16 %v1510
        %v1543 = vunpack.c.l.b16 %v1511
        %v1544 = vunpack.c.l.b16 %v1512
        %v1545 = vunpack.c.l.b16 %v1513
        %v1546 = vunpack.c.l.b16 %v1514
        %v1547 = vunpack.c.l.b16 %v1515
        %v1548 = vunpack.c.l.b16 %v1516
        %v1549 = vunpack.c.l.b16 %v1517
        %v1550 = vunpack.c.l.b16 %v1518
        %v1551 = vunpack.c.l.b16 %v1519
        %v1552 = vunpack.c.l.b16 %v1520
        %v1553 = vunpack.c.l.b16 %v1521
        %v1554 = vunpack.c.l.b16 %v1522
        %v1555 = vunpack.c.l.b16 %v1523
        %v1556 = vunpack.c.l.b16 %v1524
        %v1557 = vpack.c.b16 %v1542, %v1541
        %v1558 = vpack.c.b16 %v1544, %v1543
        %v1559 = vpack.c.b16 %v1546, %v1545
        %v1560 = vpack.c.b16 %v1548, %v1547
        %v1561 = vpack.c.b16 %v1550, %v1549
        %v1562 = vpack.c.b16 %v1552, %v1551
        %v1563 = vpack.c.b16 %v1554, %v1553
        %v1564 = vpack.c.b16 %v1556, %v1555
        %1573 = vmatpush.bf16.msra.mxu0 %v1564
        %1574 = vmatpush.bf16.msra.mxu0 %v1563
        %1575 = vmatpush.bf16.msra.mxu0 %v1562
        %1576 = vmatpush.bf16.msra.mxu0 %v1561
        %1577 = vmatpush.bf16.msra.mxu0 %v1560
        %1578 = vmatpush.bf16.msra.mxu0 %v1559
        %1579 = vmatpush.bf16.msra.mxu0 %v1558
        %1580 = vmatpush.bf16.msra.mxu0 %v1557
        %1581 = vmatmul.bf16.gmra.mxu0 %v1504
        %v1582 = vpop.f32.mrf.mxu0
        %v1583 = vadd.f32 0.0, %v1582
        %v1584 = vpop.f32.mrf.mxu0
        %v1585 = vadd.f32 0.0, %v1584
        %1586 = vmatmul.bf16.gmra.mxu0 %v1505
        %v1587 = vpop.f32.mrf.mxu0
        %v1588 = vadd.f32 0.0, %v1587
        %v1589 = vpop.f32.mrf.mxu0
        %v1590 = vadd.f32 0.0, %v1589
        %1591 = vmatmul.bf16.gmra.mxu0 %v1506
        %v1592 = vpop.f32.mrf.mxu0
        %v1593 = vadd.f32 0.0, %v1592
        %v1594 = vpop.f32.mrf.mxu0
        %v1595 = vadd.f32 0.0, %v1594
        %1596 = vmatmul.bf16.gmra.mxu0 %v1507
        %v1597 = vpop.f32.mrf.mxu0
        %v1598 = vadd.f32 0.0, %v1597
        %v1599 = vpop.f32.mrf.mxu0
        %v1600 = vadd.f32 0.0, %v1599
        %1601 = vdwg.mxu0
        %v1602 = vadd.f32 %v1488, %v1583
        %v1603 = vadd.f32 %v1489, %v1585
        %v1604 = vadd.f32 %v1490, %v1588
        %v1605 = vadd.f32 %v1491, %v1590
        %v1606 = vadd.f32 %v1492, %v1593
        %v1607 = vadd.f32 %v1493, %v1595
        %v1608 = vadd.f32 %v1494, %v1598
        %v1609 = vadd.f32 %v1495, %v1600
        %v1610 = vld [vmem:[%s1381 + $0x2] sm:$0xff]
        %v1611 = vld [vmem:[%s1381 + $0x12] sm:$0xff]
        %v1612 = vld [vmem:[%s1381 + $0x22] sm:$0xff]
        %v1613 = vld [vmem:[%s1381 + $0x32] sm:$0xff]
        %v1614 = vld [vmem:[%s1381 + $0x42] sm:$0xff]
        %v1615 = vld [vmem:[%s1381 + $0x52] sm:$0xff]
        %v1616 = vld [vmem:[%s1381 + $0x62] sm:$0xff]
        %v1617 = vld [vmem:[%s1381 + $0x72] sm:$0xff]
        %v1618 = vpack.c.bf16 %v1611, %v1610
        %v1619 = vpack.c.bf16 %v1613, %v1612
        %v1620 = vpack.c.bf16 %v1615, %v1614
        %v1621 = vpack.c.bf16 %v1617, %v1616
        %s1622 = scalar_lea.vmem %s3, 512
        %v1623 = vld [vmem:[%s1622] sm:$0xf]
        %v1624 = vld [vmem:[%s1622 + $0x4] sm:$0xf]
        %v1625 = vld [vmem:[%s1622 + $0x8] sm:$0xf]
        %v1626 = vld [vmem:[%s1622 + $0xc] sm:$0xf]
        %v1627 = vld [vmem:[%s1622 + $0x10] sm:$0xf]
        %v1628 = vld [vmem:[%s1622 + $0x14] sm:$0xf]
        %v1629 = vld [vmem:[%s1622 + $0x18] sm:$0xf]
        %v1630 = vld [vmem:[%s1622 + $0x1c] sm:$0xf]
        %v1631 = vld [vmem:[%s1622 + $0x20] sm:$0xf]
        %v1632 = vld [vmem:[%s1622 + $0x24] sm:$0xf]
        %v1633 = vld [vmem:[%s1622 + $0x28] sm:$0xf]
        %v1634 = vld [vmem:[%s1622 + $0x2c] sm:$0xf]
        %v1635 = vld [vmem:[%s1622 + $0x30] sm:$0xf]
        %v1636 = vld [vmem:[%s1622 + $0x34] sm:$0xf]
        %v1637 = vld [vmem:[%s1622 + $0x38] sm:$0xf]
        %v1638 = vld [vmem:[%s1622 + $0x3c] sm:$0xf]
        %v1655 = vunpack.c.l.b16 %v1623
        %v1656 = vunpack.c.l.b16 %v1624
        %v1657 = vunpack.c.l.b16 %v1625
        %v1658 = vunpack.c.l.b16 %v1626
        %v1659 = vunpack.c.l.b16 %v1627
        %v1660 = vunpack.c.l.b16 %v1628
        %v1661 = vunpack.c.l.b16 %v1629
        %v1662 = vunpack.c.l.b16 %v1630
        %v1663 = vunpack.c.l.b16 %v1631
        %v1664 = vunpack.c.l.b16 %v1632
        %v1665 = vunpack.c.l.b16 %v1633
        %v1666 = vunpack.c.l.b16 %v1634
        %v1667 = vunpack.c.l.b16 %v1635
        %v1668 = vunpack.c.l.b16 %v1636
        %v1669 = vunpack.c.l.b16 %v1637
        %v1670 = vunpack.c.l.b16 %v1638
        %v1671 = vpack.c.b16 %v1656, %v1655
        %v1672 = vpack.c.b16 %v1658, %v1657
        %v1673 = vpack.c.b16 %v1660, %v1659
        %v1674 = vpack.c.b16 %v1662, %v1661
        %v1675 = vpack.c.b16 %v1664, %v1663
        %v1676 = vpack.c.b16 %v1666, %v1665
        %v1677 = vpack.c.b16 %v1668, %v1667
        %v1678 = vpack.c.b16 %v1670, %v1669
        %1687 = vmatpush.bf16.msra.mxu0 %v1678
        %1688 = vmatpush.bf16.msra.mxu0 %v1677
        %1689 = vmatpush.bf16.msra.mxu0 %v1676
        %1690 = vmatpush.bf16.msra.mxu0 %v1675
        %1691 = vmatpush.bf16.msra.mxu0 %v1674
        %1692 = vmatpush.bf16.msra.mxu0 %v1673
        %1693 = vmatpush.bf16.msra.mxu0 %v1672
        %1694 = vmatpush.bf16.msra.mxu0 %v1671
        %1695 = vmatmul.bf16.gmra.mxu0 %v1618
        %v1696 = vpop.f32.mrf.mxu0
        %v1697 = vadd.f32 0.0, %v1696
        %v1698 = vpop.f32.mrf.mxu0
        %v1699 = vadd.f32 0.0, %v1698
        %1700 = vmatmul.bf16.gmra.mxu0 %v1619
        %v1701 = vpop.f32.mrf.mxu0
        %v1702 = vadd.f32 0.0, %v1701
        %v1703 = vpop.f32.mrf.mxu0
        %v1704 = vadd.f32 0.0, %v1703
        %1705 = vmatmul.bf16.gmra.mxu0 %v1620
        %v1706 = vpop.f32.mrf.mxu0
        %v1707 = vadd.f32 0.0, %v1706
        %v1708 = vpop.f32.mrf.mxu0
        %v1709 = vadd.f32 0.0, %v1708
        %1710 = vmatmul.bf16.gmra.mxu0 %v1621
        %v1711 = vpop.f32.mrf.mxu0
        %v1712 = vadd.f32 0.0, %v1711
        %v1713 = vpop.f32.mrf.mxu0
        %v1714 = vadd.f32 0.0, %v1713
        %1715 = vdwg.mxu0
        %v1716 = vadd.f32 %v1602, %v1697
        %v1717 = vadd.f32 %v1603, %v1699
        %v1718 = vadd.f32 %v1604, %v1702
        %v1719 = vadd.f32 %v1605, %v1704
        %v1720 = vadd.f32 %v1606, %v1707
        %v1721 = vadd.f32 %v1607, %v1709
        %v1722 = vadd.f32 %v1608, %v1712
        %v1723 = vadd.f32 %v1609, %v1714
        %v1724 = vld [vmem:[%s4] sm:$0x1]
        %v1726 = vperm.slane %v1724, 0
        %v1728 = vadd.f32 %v1716, %v1726
        %v1729 = vadd.f32 %v1717, %v1726
        %v1730 = vadd.f32 %v1718, %v1726
        %v1731 = vadd.f32 %v1719, %v1726
        %v1732 = vadd.f32 %v1720, %v1726
        %v1733 = vadd.f32 %v1721, %v1726
        %v1734 = vadd.f32 %v1722, %v1726
        %v1735 = vadd.f32 %v1723, %v1726
        %v1736 = vmax.f32 %v1728, 0.0
        %v1737 = vmax.f32 %v1729, 0.0
        %v1738 = vmax.f32 %v1730, 0.0
        %v1739 = vmax.f32 %v1731, 0.0
        %v1740 = vmax.f32 %v1732, 0.0
        %v1741 = vmax.f32 %v1733, 0.0
        %v1742 = vmax.f32 %v1734, 0.0
        %v1743 = vmax.f32 %v1735, 0.0
        %v1744 = vmax.f32 %v1736, %v1737
        %v1746 = vrot.slane %v1744, 1
        %v1748 = vmax.f32 %v1744, %v1746
        %v1749 = vmax.f32 %v1738, %v1739
        %v1751 = vrot.slane %v1749, 1
        %v1753 = vmax.f32 %v1749, %v1751
        %v1754 = vmax.f32 %v1740, %v1741
        %v1756 = vrot.slane %v1754, 1
        %v1758 = vmax.f32 %v1754, %v1756
        %v1759 = vmax.f32 %v1742, %v1743
        %v1761 = vrot.slane %v1759, 1
        %v1763 = vmax.f32 %v1759, %v1761
        %v1765 = vrot.slane %v1748, 2
        %v1767 = vadd.f32 %v1748, %v1765
        %v1768 = vadd.f32 %v1767, %v1753
        %v1770 = vrot.slane %v1753, 2
        %v1772 = vadd.f32 %v1768, %v1770
        %v1773 = vmul.f32 %v1772, 0.25
        %v1775 = vrot.slane %v1758, 2
        %v1777 = vadd.f32 %v1758, %v1775
        %v1778 = vadd.f32 %v1777, %v1763
        %v1780 = vrot.slane %v1763, 2
        %v1782 = vadd.f32 %v1778, %v1780
        %v1783 = vmul.f32 %v1782, 0.25
        %v1785 = vrot.slane %v1773, 4
        %v1788 = vrot.slane %v1783, 4
        %v1790 = vpack.c.bf16 %v1773, %v1773
        %v1791 = vpack.c.bf16 %v1785, %v1785
        %v1792 = vpack.c.bf16 %v1783, %v1783
        %v1793 = vpack.c.bf16 %v1788, %v1788
        %v1794 = vld [vmem:[%s5] sm:$0xf]
        %v1795 = vld [vmem:[%s5 + $0x4] sm:$0xf]
        %v1796 = vld [vmem:[%s5 + $0x8] sm:$0xf]
        %v1797 = vld [vmem:[%s5 + $0xc] sm:$0xf]
        %v1798 = vld [vmem:[%s5 + $0x10] sm:$0xf]
        %v1799 = vld [vmem:[%s5 + $0x14] sm:$0xf]
        %v1800 = vld [vmem:[%s5 + $0x18] sm:$0xf]
        %v1801 = vld [vmem:[%s5 + $0x1c] sm:$0xf]
        %v1802 = vld [vmem:[%s5 + $0x20] sm:$0xf]
        %v1803 = vld [vmem:[%s5 + $0x24] sm:$0xf]
        %v1804 = vld [vmem:[%s5 + $0x28] sm:$0xf]
        %v1805 = vld [vmem:[%s5 + $0x2c] sm:$0xf]
        %v1806 = vld [vmem:[%s5 + $0x30] sm:$0xf]
        %v1807 = vld [vmem:[%s5 + $0x34] sm:$0xf]
        %v1808 = vld [vmem:[%s5 + $0x38] sm:$0xf]
        %v1809 = vld [vmem:[%s5 + $0x3c] sm:$0xf]
        %v1810 = vld [vmem:[%s5 + $0x40] sm:$0xf]
        %v1811 = vld [vmem:[%s5 + $0x44] sm:$0xf]
        %v1812 = vld [vmem:[%s5 + $0x48] sm:$0xf]
        %v1813 = vld [vmem:[%s5 + $0x4c] sm:$0xf]
        %v1814 = vld [vmem:[%s5 + $0x50] sm:$0xf]
        %v1815 = vld [vmem:[%s5 + $0x54] sm:$0xf]
        %v1816 = vld [vmem:[%s5 + $0x58] sm:$0xf]
        %v1817 = vld [vmem:[%s5 + $0x5c] sm:$0xf]
        %v1818 = vld [vmem:[%s5 + $0x60] sm:$0xf]
        %v1819 = vld [vmem:[%s5 + $0x64] sm:$0xf]
        %v1820 = vld [vmem:[%s5 + $0x68] sm:$0xf]
        %v1821 = vld [vmem:[%s5 + $0x6c] sm:$0xf]
        %v1822 = vld [vmem:[%s5 + $0x70] sm:$0xf]
        %v1823 = vld [vmem:[%s5 + $0x74] sm:$0xf]
        %v1824 = vld [vmem:[%s5 + $0x78] sm:$0xf]
        %v1825 = vld [vmem:[%s5 + $0x7c] sm:$0xf]
        %v1826 = vld [vmem:[%s5 + $0x80] sm:$0xf]
        %v1827 = vld [vmem:[%s5 + $0x84] sm:$0xf]
        %v1828 = vld [vmem:[%s5 + $0x88] sm:$0xf]
        %v1829 = vld [vmem:[%s5 + $0x8c] sm:$0xf]
        %v1830 = vld [vmem:[%s5 + $0x90] sm:$0xf]
        %v1831 = vld [vmem:[%s5 + $0x94] sm:$0xf]
        %v1832 = vld [vmem:[%s5 + $0x98] sm:$0xf]
        %v1833 = vld [vmem:[%s5 + $0x9c] sm:$0xf]
        %v1834 = vld [vmem:[%s5 + $0xa0] sm:$0xf]
        %v1835 = vld [vmem:[%s5 + $0xa4] sm:$0xf]
        %v1836 = vld [vmem:[%s5 + $0xa8] sm:$0xf]
        %v1837 = vld [vmem:[%s5 + $0xac] sm:$0xf]
        %v1838 = vld [vmem:[%s5 + $0xb0] sm:$0xf]
        %v1839 = vld [vmem:[%s5 + $0xb4] sm:$0xf]
        %v1840 = vld [vmem:[%s5 + $0xb8] sm:$0xf]
        %v1841 = vld [vmem:[%s5 + $0xbc] sm:$0xf]
        %v1842 = vld [vmem:[%s5 + $0xc0] sm:$0xf]
        %v1843 = vld [vmem:[%s5 + $0xc4] sm:$0xf]
        %v1844 = vld [vmem:[%s5 + $0xc8] sm:$0xf]
        %v1845 = vld [vmem:[%s5 + $0xcc] sm:$0xf]
        %v1846 = vld [vmem:[%s5 + $0xd0] sm:$0xf]
        %v1847 = vld [vmem:[%s5 + $0xd4] sm:$0xf]
        %v1848 = vld [vmem:[%s5 + $0xd8] sm:$0xf]
        %v1849 = vld [vmem:[%s5 + $0xdc] sm:$0xf]
        %v1850 = vld [vmem:[%s5 + $0xe0] sm:$0xf]
        %v1851 = vld [vmem:[%s5 + $0xe4] sm:$0xf]
        %v1852 = vld [vmem:[%s5 + $0xe8] sm:$0xf]
        %v1853 = vld [vmem:[%s5 + $0xec] sm:$0xf]
        %v1854 = vld [vmem:[%s5 + $0xf0] sm:$0xf]
        %v1855 = vld [vmem:[%s5 + $0xf4] sm:$0xf]
        %v1856 = vld [vmem:[%s5 + $0xf8] sm:$0xf]
        %v1857 = vld [vmem:[%s5 + $0xfc] sm:$0xf]
        %v1858 = vld [vmem:[%s6] sm:$0x1]
        %v1923 = vunpack.c.l.b16 %v1794
        %v1924 = vunpack.c.l.b16 %v1795
        %v1925 = vunpack.c.l.b16 %v1796
        %v1926 = vunpack.c.l.b16 %v1797
        %v1927 = vunpack.c.l.b16 %v1798
        %v1928 = vunpack.c.l.b16 %v1799
        %v1929 = vunpack.c.l.b16 %v1800
        %v1930 = vunpack.c.l.b16 %v1801
        %v1931 = vunpack.c.l.b16 %v1802
        %v1932 = vunpack.c.l.b16 %v1803
        %v1933 = vunpack.c.l.b16 %v1804
        %v1934 = vunpack.c.l.b16 %v1805
        %v1935 = vunpack.c.l.b16 %v1806
        %v1936 = vunpack.c.l.b16 %v1807
        %v1937 = vunpack.c.l.b16 %v1808
        %v1938 = vunpack.c.l.b16 %v1809
        %v1939 = vunpack.c.l.b16 %v1810
        %v1940 = vunpack.c.l.b16 %v1811
        %v1941 = vunpack.c.l.b16 %v1812
        %v1942 = vunpack.c.l.b16 %v1813
        %v1943 = vunpack.c.l.b16 %v1814
        %v1944 = vunpack.c.l.b16 %v1815
        %v1945 = vunpack.c.l.b16 %v1816
        %v1946 = vunpack.c.l.b16 %v1817
        %v1947 = vunpack.c.l.b16 %v1818
        %v1948 = vunpack.c.l.b16 %v1819
        %v1949 = vunpack.c.l.b16 %v1820
        %v1950 = vunpack.c.l.b16 %v1821
        %v1951 = vunpack.c.l.b16 %v1822
        %v1952 = vunpack.c.l.b16 %v1823
        %v1953 = vunpack.c.l.b16 %v1824
        %v1954 = vunpack.c.l.b16 %v1825
        %v1955 = vunpack.c.l.b16 %v1826
        %v1956 = vunpack.c.l.b16 %v1827
        %v1957 = vunpack.c.l.b16 %v1828
        %v1958 = vunpack.c.l.b16 %v1829
        %v1959 = vunpack.c.l.b16 %v1830
        %v1960 = vunpack.c.l.b16 %v1831
        %v1961 = vunpack.c.l.b16 %v1832
        %v1962 = vunpack.c.l.b16 %v1833
        %v1963 = vunpack.c.l.b16 %v1834
        %v1964 = vunpack.c.l.b16 %v1835
        %v1965 = vunpack.c.l.b16 %v1836
        %v1966 = vunpack.c.l.b16 %v1837
        %v1967 = vunpack.c.l.b16 %v1838
        %v1968 = vunpack.c.l.b16 %v1839
        %v1969 = vunpack.c.l.b16 %v1840
        %v1970 = vunpack.c.l.b16 %v1841
        %v1971 = vunpack.c.l.b16 %v1842
        %v1972 = vunpack.c.l.b16 %v1843
        %v1973 = vunpack.c.l.b16 %v1844
        %v1974 = vunpack.c.l.b16 %v1845
        %v1975 = vunpack.c.l.b16 %v1846
        %v1976 = vunpack.c.l.b16 %v1847
        %v1977 = vunpack.c.l.b16 %v1848
        %v1978 = vunpack.c.l.b16 %v1849
        %v1979 = vunpack.c.l.b16 %v1850
        %v1980 = vunpack.c.l.b16 %v1851
        %v1981 = vunpack.c.l.b16 %v1852
        %v1982 = vunpack.c.l.b16 %v1853
        %v1983 = vunpack.c.l.b16 %v1854
        %v1984 = vunpack.c.l.b16 %v1855
        %v1985 = vunpack.c.l.b16 %v1856
        %v1986 = vunpack.c.l.b16 %v1857
        %v1987 = vpack.c.b16 %v1924, %v1923
        %v1988 = vpack.c.b16 %v1926, %v1925
        %v1989 = vpack.c.b16 %v1928, %v1927
        %v1990 = vpack.c.b16 %v1930, %v1929
        %v1991 = vpack.c.b16 %v1932, %v1931
        %v1992 = vpack.c.b16 %v1934, %v1933
        %v1993 = vpack.c.b16 %v1936, %v1935
        %v1994 = vpack.c.b16 %v1938, %v1937
        %v1995 = vpack.c.b16 %v1940, %v1939
        %v1996 = vpack.c.b16 %v1942, %v1941
        %v1997 = vpack.c.b16 %v1944, %v1943
        %v1998 = vpack.c.b16 %v1946, %v1945
        %v1999 = vpack.c.b16 %v1948, %v1947
        %v2000 = vpack.c.b16 %v1950, %v1949
        %v2001 = vpack.c.b16 %v1952, %v1951
        %v2002 = vpack.c.b16 %v1954, %v1953
        %v2003 = vpack.c.b16 %v1956, %v1955
        %v2004 = vpack.c.b16 %v1958, %v1957
        %v2005 = vpack.c.b16 %v1960, %v1959
        %v2006 = vpack.c.b16 %v1962, %v1961
        %v2007 = vpack.c.b16 %v1964, %v1963
        %v2008 = vpack.c.b16 %v1966, %v1965
        %v2009 = vpack.c.b16 %v1968, %v1967
        %v2010 = vpack.c.b16 %v1970, %v1969
        %v2011 = vpack.c.b16 %v1972, %v1971
        %v2012 = vpack.c.b16 %v1974, %v1973
        %v2013 = vpack.c.b16 %v1976, %v1975
        %v2014 = vpack.c.b16 %v1978, %v1977
        %v2015 = vpack.c.b16 %v1980, %v1979
        %v2016 = vpack.c.b16 %v1982, %v1981
        %v2017 = vpack.c.b16 %v1984, %v1983
        %v2018 = vpack.c.b16 %v1986, %v1985
        %2051 = vmatpush.bf16.msra.mxu0 %v1994
        %2052 = vmatpush.bf16.msra.mxu0 %v1993
        %2053 = vmatpush.bf16.msra.mxu0 %v1992
        %2054 = vmatpush.bf16.msra.mxu0 %v1991
        %2055 = vmatpush.bf16.msra.mxu0 %v1990
        %2056 = vmatpush.bf16.msra.mxu0 %v1989
        %2057 = vmatpush.bf16.msra.mxu0 %v1988
        %2058 = vmatpush.bf16.msra.mxu0 %v1987
        %2059 = vmatmul.bf16.gmra.mxu0 %v1790
        %v2060 = vpop.f32.mrf.mxu0
        %v2061 = vadd.f32 %v1858, %v2060
        %v2062 = vpop.f32.mrf.mxu0
        %2063 = vdwg.mxu0
        %2064 = vmatpush.bf16.msra.mxu0 %v2002
        %2065 = vmatpush.bf16.msra.mxu0 %v2001
        %2066 = vmatpush.bf16.msra.mxu0 %v2000
        %2067 = vmatpush.bf16.msra.mxu0 %v1999
        %2068 = vmatpush.bf16.msra.mxu0 %v1998
        %2069 = vmatpush.bf16.msra.mxu0 %v1997
        %2070 = vmatpush.bf16.msra.mxu0 %v1996
        %2071 = vmatpush.bf16.msra.mxu0 %v1995
        %2072 = vmatmul.bf16.gmra.mxu0 %v1791
        %v2073 = vpop.f32.mrf.mxu0
        %v2074 = vadd.f32 %v2061, %v2073
        %v2075 = vpop.f32.mrf.mxu0
        %2076 = vdwg.mxu0
        %2077 = vmatpush.bf16.msra.mxu0 %v2010
        %2078 = vmatpush.bf16.msra.mxu0 %v2009
        %2079 = vmatpush.bf16.msra.mxu0 %v2008
        %2080 = vmatpush.bf16.msra.mxu0 %v2007
        %2081 = vmatpush.bf16.msra.mxu0 %v2006
        %2082 = vmatpush.bf16.msra.mxu0 %v2005
        %2083 = vmatpush.bf16.msra.mxu0 %v2004
        %2084 = vmatpush.bf16.msra.mxu0 %v2003
        %2085 = vmatmul.bf16.gmra.mxu0 %v1792
        %v2086 = vpop.f32.mrf.mxu0
        %v2087 = vadd.f32 %v2074, %v2086
        %v2088 = vpop.f32.mrf.mxu0
        %2089 = vdwg.mxu0
        %2090 = vmatpush.bf16.msra.mxu0 %v2018
        %2091 = vmatpush.bf16.msra.mxu0 %v2017
        %2092 = vmatpush.bf16.msra.mxu0 %v2016
        %2093 = vmatpush.bf16.msra.mxu0 %v2015
        %2094 = vmatpush.bf16.msra.mxu0 %v2014
        %2095 = vmatpush.bf16.msra.mxu0 %v2013
        %2096 = vmatpush.bf16.msra.mxu0 %v2012
        %2097 = vmatpush.bf16.msra.mxu0 %v2011
        %2098 = vmatmul.bf16.gmra.mxu0 %v1793
        %v2099 = vpop.f32.mrf.mxu0
        %v2100 = vadd.f32 %v2087, %v2099
        %v2101 = vpop.f32.mrf.mxu0
        %2102 = vdwg.mxu0
        %v2103 = vmax.f32 %v2100, 0.0
        %v2104 = vpack.c.bf16 %v2103, %v2103
        %v2105 = vld [vmem:[%s7] sm:$0xf]
        %v2106 = vld [vmem:[%s7 + $0x4] sm:$0xf]
        %v2107 = vld [vmem:[%s7 + $0x8] sm:$0xf]
        %v2108 = vld [vmem:[%s7 + $0xc] sm:$0xf]
        %v2109 = vld [vmem:[%s7 + $0x10] sm:$0xf]
        %v2110 = vld [vmem:[%s7 + $0x14] sm:$0xf]
        %v2111 = vld [vmem:[%s7 + $0x18] sm:$0xf]
        %v2112 = vld [vmem:[%s7 + $0x1c] sm:$0xf]
        %v2113 = vld [vmem:[%s7 + $0x20] sm:$0xf]
        %v2114 = vld [vmem:[%s7 + $0x24] sm:$0xf]
        %v2115 = vld [vmem:[%s7 + $0x28] sm:$0xf]
        %v2116 = vld [vmem:[%s7 + $0x2c] sm:$0xf]
        %v2117 = vld [vmem:[%s7 + $0x30] sm:$0xf]
        %v2118 = vld [vmem:[%s7 + $0x34] sm:$0xf]
        %v2119 = vld [vmem:[%s7 + $0x38] sm:$0xf]
        %v2120 = vld [vmem:[%s7 + $0x3c] sm:$0xf]
        %v2121 = vld [vmem:[%s8] sm:$0x1]
        %v2138 = vunpack.c.l.b16 %v2105
        %v2139 = vunpack.c.l.b16 %v2106
        %v2140 = vunpack.c.l.b16 %v2107
        %v2141 = vunpack.c.l.b16 %v2108
        %v2142 = vunpack.c.l.b16 %v2109
        %v2143 = vunpack.c.l.b16 %v2110
        %v2144 = vunpack.c.l.b16 %v2111
        %v2145 = vunpack.c.l.b16 %v2112
        %v2146 = vunpack.c.l.b16 %v2113
        %v2147 = vunpack.c.l.b16 %v2114
        %v2148 = vunpack.c.l.b16 %v2115
        %v2149 = vunpack.c.l.b16 %v2116
        %v2150 = vunpack.c.l.b16 %v2117
        %v2151 = vunpack.c.l.b16 %v2118
        %v2152 = vunpack.c.l.b16 %v2119
        %v2153 = vunpack.c.l.b16 %v2120
        %v2154 = vpack.c.b16 %v2139, %v2138
        %v2155 = vpack.c.b16 %v2141, %v2140
        %v2156 = vpack.c.b16 %v2143, %v2142
        %v2157 = vpack.c.b16 %v2145, %v2144
        %v2158 = vpack.c.b16 %v2147, %v2146
        %v2159 = vpack.c.b16 %v2149, %v2148
        %v2160 = vpack.c.b16 %v2151, %v2150
        %v2161 = vpack.c.b16 %v2153, %v2152
        %2170 = vmatpush.bf16.msra.mxu0 %v2161
        %2171 = vmatpush.bf16.msra.mxu0 %v2160
        %2172 = vmatpush.bf16.msra.mxu0 %v2159
        %2173 = vmatpush.bf16.msra.mxu0 %v2158
        %2174 = vmatpush.bf16.msra.mxu0 %v2157
        %2175 = vmatpush.bf16.msra.mxu0 %v2156
        %2176 = vmatpush.bf16.msra.mxu0 %v2155
        %2177 = vmatpush.bf16.msra.mxu0 %v2154
        %2178 = vmatmul.bf16.gmra.mxu0 %v2104
        %v2179 = vpop.f32.mrf.mxu0
        %v2180 = vadd.f32 %v2121, %v2179
        %v2181 = vpop.f32.mrf.mxu0
        %2182 = vdwg.mxu0
        %2183 = vst [vmem:[%s324] sm:$0x1] %v2180
        %s2184 = sand.u32 %s225, 1
        %s2185 = scalar_lea.sflag [#allocation4], %s2184
        %s2186 = sand.u32 %s225, 1
        %s2187 = scalar_lea.vmem [#allocation3], %s2186
        // Predicated region
        $region57: #{forward_pallas.1} parent=55 // pred_check
          %p2188 = pneg %p235
        $region58: #{forward_pallas.1} parent=55 // pred_check_branch
          %2190 = sbr.rel (%p2188) target = $region60
        $region59: #{forward_pallas.1} parent=55 // pred_region
          %2192 = vsyncadd %s2185, 0
          %s2193 = scalar_lea.hbm %s9, %s23
          %s2195 = sshll.u32 %s2187, 4
          %s2196 = int_to_ptr.vmem [resolvable:$true] %s2195
          %s2197 = sshll.u32 %s2193, 4
          %s2198 = int_to_ptr.hbm [resolvable:$true] %s2197
          %2200 = dma.vmem_to_hbm [thread:$0]  %s2196, 16, %s2198, %s2185
        $region60: #{forward_pallas.1} parent=55 // pred_fallthru
          _
      $region56: #{forward_pallas.1} parent=5 // pred_fallthru
        _
      %p2201 = scmp.le.s32.totalorder 2, %s18
      // Predicated region
      $region61: #{forward_pallas.1} parent=5 // pred_check
        %p2202 = pneg %p2201
      $region62: #{forward_pallas.1} parent=5 // pred_check_branch
        %2204 = sbr.rel (%p2202) target = $region64
      $region63: #{forward_pallas.1} parent=5 // pred_region
        %s2205 = ssub.s32 %s18, 2
        // Predicated region
        $region65: #{forward_pallas.1} parent=63 // pred_check
          %p2206 = pneg %p241
        $region66: #{forward_pallas.1} parent=63 // pred_check_branch
          %2208 = sbr.rel (%p2206) target = $region68
        $region67: #{forward_pallas.1} parent=63 // pred_region
          %s2209 = sand.u32 %s226, 1
          %s2210 = scalar_lea.sflag [#allocation4], %s2209
          %s2211 = sand.u32 %s226, 1
          %s2212 = scalar_lea.vmem [#allocation3], %s2211
          %2214 = dma.done %s2210, 16
        $region68: #{forward_pallas.1} parent=63 // pred_fallthru
          _
      $region64: #{forward_pallas.1} parent=5 // pred_fallthru
        _
    $region6: #{forward_pallas.1} parent=1 // loop_footer
      %s22 = sadd.s32 1, %s18
    $region7: #{forward_pallas.1} parent=1 // loop_footer_branch
      %17 = sbr.rel target = $region3
    $region8: #{forward_pallas.1} parent=1 // loop_exit
      _
    %2215 = vsyncpa [#allocation4], 1
    %s2216 = scalar_lea.sflag [#allocation4], 1
    %2217 = vsyncpa %s2216, 1

</llo_original>
